<compile_context>
chip_gen: v6e
topology: v6e:2x2x1
jax: 0.10.0
libtpu: 0.0.40
codegen_flags: <defaults>
</compile_context>

<pallas_src>
import numpy as np
import jax
import jax.numpy as jnp
from jax.experimental import pallas as pl
from jax.experimental.pallas import tpu as pltpu

# logical sizes (match the PyTorch module at toy scale)
N, F_IN, HID, F_OUT = 64, 4, 32, 8
# padded, lane-dense sizes used inside the kernel
N_PAD = 128          # source/node axis padded to one full lane width
F_PAD = 128          # feature axis (input / hidden / output channels)

NEG_SLOPE = 0.2      # GATConv default negative_slope
NEG_INF = -1e30


# --------------------------------------------------------------------------
# Pallas kernel
# --------------------------------------------------------------------------
def gat_kernel(x_ref, bias1_ref, bias2_ref, w1_ref, w2_ref, wfc_ref, pvec_ref,
               out_ref, h2in_ref):
    # packed small parameter vectors (one DMA instead of many tiny ones)
    as1 = pvec_ref[0:1, :]
    b1 = pvec_ref[1:2, :]
    as2 = pvec_ref[2:3, :]
    b2 = pvec_ref[3:4, :]
    bfc = pvec_ref[4:5, :]

    def gat_layer(h_in_bf, w_ref, a_src_vec, bias, ebias_ref):
        # Fused feature matmul (bf16 MXU, f32 accumulate):
        #   columns [0:HID)   -> h = lin_src(x)
        #   column  F_PAD-1   -> alpha_dst = <h, att_dst>  (att_dst folded into W)
        h = jnp.dot(h_in_bf, w_ref[...],
                    preferred_element_type=jnp.float32)        # (N_PAD, F_PAD)
        a_dst = h[0:N, F_PAD - 1:F_PAD]                        # (N, 1) real dst rows
        h_bf = h.astype(jnp.bfloat16)

        # alpha_src[j] = <h[j], att_src>  -> (1, N_PAD) row via one thin MXU pass.
        # INVARIANT: pvec[:, HID:] (incl. the folded att_dst column F_PAD-1) is
        # exactly zero; the contraction runs over all F_PAD columns of h.
        a_src = jax.lax.dot_general(
            a_src_vec.astype(jnp.bfloat16), h_bf,
            dimension_numbers=(((1,), (1,)), ((), ())),
            preferred_element_type=jnp.float32)

        # scores for edges j -> i, real destination rows only: (N, N_PAD)
        # ebias = c_edge * edge_attr on edges, -1e30 on non-edges (host-fused)
        s = a_dst + a_src + ebias_ref[...].astype(jnp.float32)
        s = jnp.maximum(s, NEG_SLOPE * s)                      # LeakyReLU(0.2)
        s = s - jnp.max(s, axis=-1, keepdims=True)             # row-wise softmax
        p = jnp.exp(s)                    # masked entries underflow to exactly 0
        inv = pl.reciprocal(jnp.sum(p, axis=-1, keepdims=True), approx=True)

        # aggregate first, normalise after (commutes with the weighted sum):
        #   out[i] = (sum_j p[i,j] * h[j]) / sum_j p[i,j] + bias
        agg = jnp.dot(p.astype(jnp.bfloat16), h_bf,
                      preferred_element_type=jnp.float32)      # (N, F_PAD)
        return agg * inv + bias

    h1 = gat_layer(x_ref[...], w1_ref, as1, b1, bias1_ref)
    h1 = jnp.maximum(h1, 0.0)                                  # F.relu

    # layer-2 source features: real rows = relu(h1), pad rows = 0 (their
    # attention weight is exactly 0, so any finite value would do)
    h2in_ref[0:N, :] = h1.astype(jnp.bfloat16)
    h2in_ref[N:N_PAD, :] = jnp.zeros((N_PAD - N, F_PAD), jnp.bfloat16)

    h2 = gat_layer(h2in_ref[...], w2_ref, as2, b2, bias2_ref)
    out_ref[...] = (jnp.dot(h2.astype(jnp.bfloat16), wfc_ref[...],
                            preferred_element_type=jnp.float32) + bfc)


def gat_forward(x_bf, bias1_bf, bias2_bf, w1_bf, w2_bf, wfc_bf, pvec):
    vmem = lambda: pl.BlockSpec(memory_space=pltpu.MemorySpace.VMEM)
    return pl.pallas_call(
        gat_kernel,
        out_shape=jax.ShapeDtypeStruct((N, F_PAD), jnp.float32),
        in_specs=[vmem() for _ in range(7)],
        out_specs=vmem(),
        scratch_shapes=[pltpu.VMEM((N_PAD, F_PAD), jnp.bfloat16)],
        compiler_params=pltpu.CompilerParams(vmem_limit_bytes=32 * 1024 * 1024),
    )(x_bf, bias1_bf, bias2_bf, w1_bf, w2_bf, wfc_bf, pvec)


# --------------------------------------------------------------------------
# Host-side graph / parameter preparation
# --------------------------------------------------------------------------
def build_dense_graph(n, src, dst, edge_attr):
    """GATConv preprocessing: remove_self_loops then
    add_self_loops(fill_value='mean') (mean of incoming edge attrs per dst)."""
    src = np.asarray(src); dst = np.asarray(dst); ea = np.asarray(edge_attr)[:, 0]
    keep = src != dst
    src, dst, ea = src[keep], dst[keep], ea[keep]
    mask = np.zeros((n, n), np.float32)
    eat = np.zeros((n, n), np.float32)
    mask[dst, src] = 1.0
    eat[dst, src] = ea
    deg = mask.sum(axis=1)
    mean_in = np.where(deg > 0, eat.sum(axis=1) / np.maximum(deg, 1.0), 0.0)
    idx = np.arange(n)
    mask[idx, idx] = 1.0
    eat[idx, idx] = mean_in.astype(np.float32)
    return mask, eat


def build_edge_bias(mask_nn, eattr_nn, c_edge_l):
    """Fused per-layer edge bias:  c_edge * eattr on edges, -1e30 elsewhere.
    Only the N real destination rows are kept; source columns padded to N_PAD
    are fully masked."""
    bias = np.full((N, N_PAD), NEG_INF, np.float32)
    bias[:, :N] = np.where(mask_nn > 0, np.float32(c_edge_l) * eattr_nn,
                           np.float32(NEG_INF))
    return bias


def pack_params(key):
    """Build logical GAT params, pad to lane width, fold att_dst into an extra
    weight column, and coalesce the small vectors into one (8,128)."""
    ks = jax.random.split(key, 14)

    def glorot(k, shape):
        fan = shape[0] + shape[1]
        return np.asarray(jax.random.normal(k, shape, jnp.float32)) * np.sqrt(2.0 / fan)

    w1 = glorot(ks[0], (F_IN, HID)); as1 = glorot(ks[1], (1, HID)); ad1 = glorot(ks[2], (1, HID))
    we1 = glorot(ks[3], (1, HID));  ae1 = glorot(ks[4], (1, HID))
    b1 = 0.1 * np.asarray(jax.random.normal(ks[5], (1, HID), jnp.float32))
    w2 = glorot(ks[6], (HID, HID)); as2 = glorot(ks[7], (1, HID)); ad2 = glorot(ks[8], (1, HID))
    we2 = glorot(ks[9], (1, HID));  ae2 = glorot(ks[10], (1, HID))
    b2 = 0.1 * np.asarray(jax.random.normal(ks[11], (1, HID), jnp.float32))
    wfc = glorot(ks[12], (HID, F_OUT))
    bfc = 0.1 * np.asarray(jax.random.normal(ks[13], (1, F_OUT), jnp.float32))

    # edge_dim == 1: the projected-edge attention term collapses to one scalar
    # per layer:  alpha_edge = edge_attr * <W_edge, att_edge>
    c_edge = np.array([float((we1 * ae1).sum()), float((we2 * ae2).sum())], np.float32)

    # padded weights with att_dst folded into the last column (W @ att_dst^T)
    w1p = np.zeros((F_PAD, F_PAD), np.float32)
    w1p[:F_IN, :HID] = w1
    w1p[:F_IN, F_PAD - 1] = w1 @ ad1[0]
    w2p = np.zeros((F_PAD, F_PAD), np.float32)
    w2p[:HID, :HID] = w2
    w2p[:HID, F_PAD - 1] = w2 @ ad2[0]
    wfcp = np.zeros((F_PAD, F_PAD), np.float32)
    wfcp[:HID, :F_OUT] = wfc

    # pvec[:, HID:] (incl. col F_PAD-1) must stay exactly zero (a_src contraction)
    pvec = np.zeros((8, F_PAD), np.float32)
    pvec[0, :HID] = as1[0]
    pvec[1, :HID] = b1[0]
    pvec[2, :HID] = as2[0]
    pvec[3, :HID] = b2[0]
    pvec[4, :F_OUT] = bfc[0]
    return w1p, w2p, wfcp, pvec, c_edge


# --------------------------------------------------------------------------
# Mirrored numpy reference (same padded / folded / bf16-rounded math)
# --------------------------------------------------------------------------
def _f32(a):
    return np.asarray(jnp.asarray(a).astype(jnp.float32))


def _bf(a):
    return np.asarray(jnp.asarray(a, jnp.float32).astype(jnp.bfloat16).astype(jnp.float32))


def reference_forward(x_bf, bias1_bf, bias2_bf, w1_bf, w2_bf, wfc_bf, pvec):
    xr = _f32(x_bf)
    e1 = _f32(bias1_bf); e2 = _f32(bias2_bf)
    w1r, w2r, wfcr = _f32(w1_bf), _f32(w2_bf), _f32(wfc_bf)
    pv = np.asarray(pvec)
    as1, b1, as2, b2, bfc = pv[0:1], pv[1:2], pv[2:3], pv[3:4], pv[4:5]

    def layer(h_in, w, a_src_vec, bias, ebias):
        h = _bf(h_in) @ w                                   # (N_PAD, F_PAD)
        a_dst = h[:N, F_PAD - 1:F_PAD]                      # (N, 1)
        h_b = _bf(h)
        a_src = _bf(a_src_vec) @ h_b.T                      # (1, N_PAD)
        s = a_dst + a_src + ebias                           # (N, N_PAD)
        s = np.maximum(s, np.float32(NEG_SLOPE) * s)
        s = s - s.max(-1, keepdims=True)
        p = np.exp(s)
        inv = 1.0 / p.sum(-1, keepdims=True)                # kernel uses approx vrcp
        return (_bf(p) @ h_b) * inv + bias

    h1 = np.maximum(layer(xr, w1r, as1, b1, e1), 0.0)       # (N, F_PAD)
    h1f = np.zeros((N_PAD, F_PAD), np.float32)
    h1f[:N] = _bf(h1)
    h2 = layer(h1f, w2r, as2, b2, e2)                       # (N, F_PAD)
    return _bf(h2) @ wfcr + bfc


# --------------------------------------------------------------------------
if __name__ == "__main__":
    key = jax.random.PRNGKey(0)
    k_x, k_e, k_p = jax.random.split(key, 3)

    # node features
    x = np.asarray(jax.random.normal(k_x, (N, F_IN), dtype=jnp.float32))

    # deterministic sparse graph (no duplicates, no self loops): 3 out-edges/node
    base = np.arange(N)
    src = np.concatenate([base, base, base])
    dst = np.concatenate([(base + 1) % N, (base + 3) % N, (base - 1) % N])
    edge_attr = np.asarray(jax.random.normal(k_e, (src.shape[0], 1), dtype=jnp.float32))

    mask_np, eattr_np = build_dense_graph(N, src, dst, edge_attr)
    w1p, w2p, wfcp, pvec, c_edge = pack_params(k_p)

    # fused per-layer edge bias, (N, N_PAD), bf16 on device
    bias1_np = build_edge_bias(mask_np, eattr_np, c_edge[0])
    bias2_np = build_edge_bias(mask_np, eattr_np, c_edge[1])

    # node features padded to a lane-dense (N_PAD, F_PAD) bf16 slab
    x_p = np.zeros((N_PAD, F_PAD), np.float32)
    x_p[:N, :F_IN] = x

    x_bf = jnp.asarray(x_p, jnp.bfloat16)
    bias1_bf = jnp.asarray(bias1_np, jnp.bfloat16)
    bias2_bf = jnp.asarray(bias2_np, jnp.bfloat16)
    w1_bf = jnp.asarray(w1p, jnp.bfloat16)
    w2_bf = jnp.asarray(w2p, jnp.bfloat16)
    wfc_bf = jnp.asarray(wfcp, jnp.bfloat16)
    pvec_j = jnp.asarray(pvec)

    out_pad = gat_forward(x_bf, bias1_bf, bias2_bf, w1_bf, w2_bf, wfc_bf, pvec_j)
    out_pad = jax.block_until_ready(out_pad)
    out = np.asarray(out_pad)[:, :F_OUT]

    ref = reference_forward(x_bf, bias1_bf, bias2_bf, w1_bf, w2_bf, wfc_bf,
                            pvec)[:, :F_OUT]

    assert out.shape == (N, F_OUT)
    # tolerance covers MXU accumulation order, EUP exp, approx-vrcp reciprocal
    # (~2^-12 rel) and bf16 requantisation boundary effects
    assert np.allclose(out, ref, atol=3e-3, rtol=3e-3), float(np.abs(out - ref).max())
    print("KERNEL_OK")
</pallas_src>

<mosaic_0001>
module attributes {stable_mosaic.version = 11 : i64} {
  func.func @gat_kernel(%arg0: memref<128x128xbf16, #tpu.memory_space<vmem>>, %arg1: memref<64x128xbf16, #tpu.memory_space<vmem>>, %arg2: memref<64x128xbf16, #tpu.memory_space<vmem>>, %arg3: memref<128x128xbf16, #tpu.memory_space<vmem>>, %arg4: memref<128x128xbf16, #tpu.memory_space<vmem>>, %arg5: memref<128x128xbf16, #tpu.memory_space<vmem>>, %arg6: memref<8x128xf32, #tpu.memory_space<vmem>>, %arg7: memref<64x128xf32, #tpu.memory_space<vmem>>, %arg8: memref<128x128xbf16, #tpu.memory_space<vmem>>) attributes {dimension_semantics = [], scalar_prefetch = 0 : i64, scratch_operands = 1 : i64, tpu.core_type = #tpu.core_type<tc>} {
    %c0 = arith.constant 0 : index
    %c0_0 = arith.constant 0 : index
    %0 = vector.load %arg6[%c0, %c0_0] : memref<8x128xf32, #tpu.memory_space<vmem>>, vector<1x128xf32>
    %c1 = arith.constant 1 : index
    %c0_1 = arith.constant 0 : index
    %1 = vector.load %arg6[%c1, %c0_1] : memref<8x128xf32, #tpu.memory_space<vmem>>, vector<1x128xf32>
    %c2 = arith.constant 2 : index
    %c0_2 = arith.constant 0 : index
    %2 = vector.load %arg6[%c2, %c0_2] : memref<8x128xf32, #tpu.memory_space<vmem>>, vector<1x128xf32>
    %c3 = arith.constant 3 : index
    %c0_3 = arith.constant 0 : index
    %3 = vector.load %arg6[%c3, %c0_3] : memref<8x128xf32, #tpu.memory_space<vmem>>, vector<1x128xf32>
    %c4 = arith.constant 4 : index
    %c0_4 = arith.constant 0 : index
    %4 = vector.load %arg6[%c4, %c0_4] : memref<8x128xf32, #tpu.memory_space<vmem>>, vector<1x128xf32>
    %c0_5 = arith.constant 0 : index
    %c0_6 = arith.constant 0 : index
    %5 = vector.load %arg0[%c0_5, %c0_6] : memref<128x128xbf16, #tpu.memory_space<vmem>>, vector<128x128xbf16>
    %c0_7 = arith.constant 0 : index
    %c0_8 = arith.constant 0 : index
    %6 = vector.load %arg3[%c0_7, %c0_8] : memref<128x128xbf16, #tpu.memory_space<vmem>>, vector<128x128xbf16>
    %cst = arith.constant dense<0.000000e+00> : vector<128x128xf32>
    %7 = tpu.matmul %5, %6, %cst {dimension_numbers = #tpu.dot_dimension_numbers<[1], [0], [0], [1], [0, 0, 1, 1], [], []>} : vector<128x128xbf16>, vector<128x128xbf16>, vector<128x128xf32> -> vector<128x128xf32>
    %8 = vector.extract_strided_slice %7 {offsets = [0, 127], sizes = [64, 1], strides = [1, 1]} : vector<128x128xf32> to vector<64x1xf32>
    %9 = arith.truncf %7 : vector<128x128xf32> to vector<128x128xbf16>
    %10 = arith.truncf %0 : vector<1x128xf32> to vector<1x128xbf16>
    %cst_9 = arith.constant dense<0.000000e+00> : vector<1x128xf32>
    %11 = tpu.matmul %10, %9, %cst_9 {dimension_numbers = #tpu.dot_dimension_numbers<[1], [1], [0], [0], [0, 0, 1, 0], [], []>} : vector<1x128xbf16>, vector<128x128xbf16>, vector<1x128xf32> -> vector<1x128xf32>
    %12 = vector.broadcast %8 : vector<64x1xf32> to vector<64x128xf32>
    %13 = vector.broadcast %11 : vector<1x128xf32> to vector<64x128xf32>
    %14 = arith.addf %12, %13 : vector<64x128xf32>
    %c0_10 = arith.constant 0 : index
    %c0_11 = arith.constant 0 : index
    %15 = vector.load %arg1[%c0_10, %c0_11] : memref<64x128xbf16, #tpu.memory_space<vmem>>, vector<64x128xbf16>
    %16 = arith.extf %15 : vector<64x128xbf16> to vector<64x128xf32>
    %17 = arith.addf %14, %16 : vector<64x128xf32>
    %cst_12 = arith.constant 2.000000e-01 : f32
    %18 = vector.broadcast %cst_12 : f32 to vector<64x128xf32>
    %19 = arith.mulf %18, %17 : vector<64x128xf32>
    %20 = arith.maximumf %17, %19 : vector<64x128xf32>
    %cst_13 = arith.constant dense<0xFF800000> : vector<64xf32>
    %21 = vector.multi_reduction <maximumf>, %20, %cst_13 [1] : vector<64x128xf32> to vector<64xf32>
    %22 = vector.shape_cast %21 : vector<64xf32> to vector<64x1xf32>
    %23 = vector.broadcast %22 : vector<64x1xf32> to vector<64x128xf32>
    %24 = arith.subf %20, %23 : vector<64x128xf32>
    %25 = math.exp %24 : vector<64x128xf32>
    %cst_14 = arith.constant dense<0.000000e+00> : vector<64xf32>
    %26 = vector.multi_reduction <add>, %25, %cst_14 [1] : vector<64x128xf32> to vector<64xf32>
    %27 = vector.shape_cast %26 : vector<64xf32> to vector<64x1xf32>
    %28 = tpu.reciprocal %27 {approx = true} : vector<64x1xf32> -> vector<64x1xf32>
    %29 = arith.truncf %25 : vector<64x128xf32> to vector<64x128xbf16>
    %cst_15 = arith.constant dense<0.000000e+00> : vector<64x128xf32>
    %30 = tpu.matmul %29, %9, %cst_15 {dimension_numbers = #tpu.dot_dimension_numbers<[1], [0], [0], [1], [0, 0, 1, 1], [], []>} : vector<64x128xbf16>, vector<128x128xbf16>, vector<64x128xf32> -> vector<64x128xf32>
    %31 = vector.broadcast %28 : vector<64x1xf32> to vector<64x128xf32>
    %32 = arith.mulf %30, %31 : vector<64x128xf32>
    %33 = vector.broadcast %1 : vector<1x128xf32> to vector<64x128xf32>
    %34 = arith.addf %32, %33 : vector<64x128xf32>
    %cst_16 = arith.constant 0.000000e+00 : f32
    %35 = vector.broadcast %cst_16 : f32 to vector<64x128xf32>
    %36 = arith.maximumf %34, %35 : vector<64x128xf32>
    %37 = arith.truncf %36 : vector<64x128xf32> to vector<64x128xbf16>
    %c0_17 = arith.constant 0 : index
    %c0_18 = arith.constant 0 : index
    %38 = vector.load %arg8[%c0_17, %c0_18] : memref<128x128xbf16, #tpu.memory_space<vmem>>, vector<64x128xbf16>
    tpu.vector_store %arg8[%c0_17, %c0_18], %37 {strides = array<i32>} : memref<128x128xbf16, #tpu.memory_space<vmem>>, vector<64x128xbf16>,
    %cst_19 = arith.constant 0.000000e+00 : bf16
    %39 = vector.broadcast %cst_19 : bf16 to vector<64x128xbf16>
    %c64 = arith.constant 64 : index
    %c0_20 = arith.constant 0 : index
    %40 = vector.load %arg8[%c64, %c0_20] : memref<128x128xbf16, #tpu.memory_space<vmem>>, vector<64x128xbf16>
    tpu.vector_store %arg8[%c64, %c0_20], %39 {strides = array<i32>} : memref<128x128xbf16, #tpu.memory_space<vmem>>, vector<64x128xbf16>,
    %c0_21 = arith.constant 0 : index
    %c0_22 = arith.constant 0 : index
    %41 = vector.load %arg8[%c0_21, %c0_22] : memref<128x128xbf16, #tpu.memory_space<vmem>>, vector<128x128xbf16>
    %c0_23 = arith.constant 0 : index
    %c0_24 = arith.constant 0 : index
    %42 = vector.load %arg4[%c0_23, %c0_24] : memref<128x128xbf16, #tpu.memory_space<vmem>>, vector<128x128xbf16>
    %cst_25 = arith.constant dense<0.000000e+00> : vector<128x128xf32>
    %43 = tpu.matmul %41, %42, %cst_25 {dimension_numbers = #tpu.dot_dimension_numbers<[1], [0], [0], [1], [0, 0, 1, 1], [], []>} : vector<128x128xbf16>, vector<128x128xbf16>, vector<128x128xf32> -> vector<128x128xf32>
    %44 = vector.extract_strided_slice %43 {offsets = [0, 127], sizes = [64, 1], strides = [1, 1]} : vector<128x128xf32> to vector<64x1xf32>
    %45 = arith.truncf %43 : vector<128x128xf32> to vector<128x128xbf16>
    %46 = arith.truncf %2 : vector<1x128xf32> to vector<1x128xbf16>
    %cst_26 = arith.constant dense<0.000000e+00> : vector<1x128xf32>
    %47 = tpu.matmul %46, %45, %cst_26 {dimension_numbers = #tpu.dot_dimension_numbers<[1], [1], [0], [0], [0, 0, 1, 0], [], []>} : vector<1x128xbf16>, vector<128x128xbf16>, vector<1x128xf32> -> vector<1x128xf32>
    %48 = vector.broadcast %44 : vector<64x1xf32> to vector<64x128xf32>
    %49 = vector.broadcast %47 : vector<1x128xf32> to vector<64x128xf32>
    %50 = arith.addf %48, %49 : vector<64x128xf32>
    %c0_27 = arith.constant 0 : index
    %c0_28 = arith.constant 0 : index
    %51 = vector.load %arg2[%c0_27, %c0_28] : memref<64x128xbf16, #tpu.memory_space<vmem>>, vector<64x128xbf16>
    %52 = arith.extf %51 : vector<64x128xbf16> to vector<64x128xf32>
    %53 = arith.addf %50, %52 : vector<64x128xf32>
    %cst_29 = arith.constant 2.000000e-01 : f32
    %54 = vector.broadcast %cst_29 : f32 to vector<64x128xf32>
    %55 = arith.mulf %54, %53 : vector<64x128xf32>
    %56 = arith.maximumf %53, %55 : vector<64x128xf32>
    %cst_30 = arith.constant dense<0xFF800000> : vector<64xf32>
    %57 = vector.multi_reduction <maximumf>, %56, %cst_30 [1] : vector<64x128xf32> to vector<64xf32>
    %58 = vector.shape_cast %57 : vector<64xf32> to vector<64x1xf32>
    %59 = vector.broadcast %58 : vector<64x1xf32> to vector<64x128xf32>
    %60 = arith.subf %56, %59 : vector<64x128xf32>
    %61 = math.exp %60 : vector<64x128xf32>
    %cst_31 = arith.constant dense<0.000000e+00> : vector<64xf32>
    %62 = vector.multi_reduction <add>, %61, %cst_31 [1] : vector<64x128xf32> to vector<64xf32>
    %63 = vector.shape_cast %62 : vector<64xf32> to vector<64x1xf32>
    %64 = tpu.reciprocal %63 {approx = true} : vector<64x1xf32> -> vector<64x1xf32>
    %65 = arith.truncf %61 : vector<64x128xf32> to vector<64x128xbf16>
    %cst_32 = arith.constant dense<0.000000e+00> : vector<64x128xf32>
    %66 = tpu.matmul %65, %45, %cst_32 {dimension_numbers = #tpu.dot_dimension_numbers<[1], [0], [0], [1], [0, 0, 1, 1], [], []>} : vector<64x128xbf16>, vector<128x128xbf16>, vector<64x128xf32> -> vector<64x128xf32>
    %67 = vector.broadcast %64 : vector<64x1xf32> to vector<64x128xf32>
    %68 = arith.mulf %66, %67 : vector<64x128xf32>
    %69 = vector.broadcast %3 : vector<1x128xf32> to vector<64x128xf32>
    %70 = arith.addf %68, %69 : vector<64x128xf32>
    %71 = arith.truncf %70 : vector<64x128xf32> to vector<64x128xbf16>
    %c0_33 = arith.constant 0 : index
    %c0_34 = arith.constant 0 : index
    %72 = vector.load %arg5[%c0_33, %c0_34] : memref<128x128xbf16, #tpu.memory_space<vmem>>, vector<128x128xbf16>
    %cst_35 = arith.constant dense<0.000000e+00> : vector<64x128xf32>
    %73 = tpu.matmul %71, %72, %cst_35 {dimension_numbers = #tpu.dot_dimension_numbers<[1], [0], [0], [1], [0, 0, 1, 1], [], []>} : vector<64x128xbf16>, vector<128x128xbf16>, vector<64x128xf32> -> vector<64x128xf32>
    %74 = vector.broadcast %4 : vector<1x128xf32> to vector<64x128xf32>
    %75 = arith.addf %73, %74 : vector<64x128xf32>
    %c0_36 = arith.constant 0 : index
    %c0_37 = arith.constant 0 : index
    %76 = vector.load %arg7[%c0_36, %c0_37] : memref<64x128xf32, #tpu.memory_space<vmem>>, vector<64x128xf32>
    tpu.vector_store %arg7[%c0_36, %c0_37], %75 {strides = array<i32>} : memref<64x128xf32, #tpu.memory_space<vmem>>, vector<64x128xf32>,
    return
  }
}

</mosaic_0001>

<llo_original>
// kernel: tpu_custom_call.1
$region0: #{tpu_custom_call.1}
  #allocation0 [shape = 'u32[]', space=smem, size = 0x4, offset = 0x4, fixed_abs, tag = 'smem constant byte address 0x4 - core index']
  #allocation1 [shape = 'u32[144,128]{1,0:T(1,128)}', space=vmem, size = 0x12000, scoped, tag = 'internal scratch']
  #allocation2 [shape = 'bf16[128,128]{1,0:T(8,128)(2,1)}', space=vmem, size = 0x8000, scoped, tag = 'scratch operand']
  %s0 = inlined_call_operand.hbm [shape: bf16[128,128], index: 0, kind: input, shape index: {}]
  %s1 = inlined_call_operand.hbm [shape: bf16[64,128], index: 1, kind: input, shape index: {}]
  %s2 = inlined_call_operand.hbm [shape: bf16[64,128], index: 2, kind: input, shape index: {}]
  %s3 = inlined_call_operand.hbm [shape: bf16[128,128], index: 3, kind: input, shape index: {}]
  %s4 = inlined_call_operand.hbm [shape: bf16[128,128], index: 4, kind: input, shape index: {}]
  %s5 = inlined_call_operand.hbm [shape: bf16[128,128], index: 5, kind: input, shape index: {}]
  %s6 = inlined_call_operand.vmem [shape: f32[8,128], index: 6, kind: input, shape index: {}]
  %s7 = inlined_call_operand.hbm [shape: f32[64,128], index: 7, kind: output, shape index: {}]
  %s8 = sld [smem:[#allocation0]]
  $region62: #{tpu_custom_call.1} parent=0
    _
  %s10 = ssub.s32 1, %s8
  %s11 = scalar_select 0, %s10, %s8
  $region1: #{tpu_custom_call.1} parent=0
    #allocation3 [shape = 'u8[32768]{0}', space=vmem, size = 0x8000, scoped, tag = 'input window, operand 0, single buffered']
    #allocation4 [shape = 's32[1]{0}', space=sflag, size = 0x4, scoped, tag = 'scoped memory for tpu_custom_call.1']
    #allocation5 [shape = 's32[1]{0}', space=sflag, size = 0x4, scoped, tag = 'scoped memory for tpu_custom_call.1']
    #allocation6 [shape = 'u8[16384]{0}', space=vmem, size = 0x4000, scoped, tag = 'input window, operand 1, single buffered']
    #allocation7 [shape = 's32[1]{0}', space=sflag, size = 0x4, scoped, tag = 'scoped memory for tpu_custom_call.1']
    #allocation8 [shape = 'u8[16384]{0}', space=vmem, size = 0x4000, scoped, tag = 'input window, operand 2, single buffered']
    #allocation9 [shape = 'u8[32768]{0}', space=vmem, size = 0x8000, scoped, tag = 'input window, operand 3, single buffered']
    #allocation10 [shape = 's32[1]{0}', space=sflag, size = 0x4, scoped, tag = 'scoped memory for tpu_custom_call.1']
    #allocation11 [shape = 'u8[32768]{0}', space=vmem, size = 0x8000, scoped, tag = 'input window, operand 4, single buffered']
    #allocation12 [shape = 'u8[32768]{0}', space=vmem, size = 0x8000, scoped, tag = 'input window, operand 5, single buffered']
    #allocation13 [shape = 's32[1]{0}', space=sflag, size = 0x4, scoped, tag = 'scoped memory for tpu_custom_call.1']
    #allocation14 [shape = 'u8[32768]{0}', space=vmem, size = 0x8000, scoped, tag = 'output window, operand 0, single buffered']
    %12 = vsyncpa [#allocation4], 0
    %13 = vsyncpa [#allocation7], 0
    %14 = vsyncpa [#allocation10], 0
    %15 = vsyncpa [#allocation13], 0
    %16 = vsyncpa [#allocation5], 0
    // Predicated region
    $region2: #{tpu_custom_call.1} parent=1 // pred_check
      _
    $region3: #{tpu_custom_call.1} parent=1 // pred_check_branch
      %18 = sbr.rel (0) target = $region5
    $region4: #{tpu_custom_call.1} parent=1 // pred_region
      %s20 = ssub.s32 1024, 1024
      %21 = vsyncadd [#allocation4], %s20
      %s22 = sshll.u32 [#allocation3], 4
      %s23 = int_to_ptr.vmem [resolvable:$true] %s22
      %28 = dma.hbm_to_vmem [thread:$0]  %s0, 1024, %s23, [#allocation4], 64, 64, 4
    $region5: #{tpu_custom_call.1} parent=1 // pred_fallthru
      _
    // Predicated region
    $region6: #{tpu_custom_call.1} parent=1 // pred_check
      _
    $region7: #{tpu_custom_call.1} parent=1 // pred_check_branch
      %30 = sbr.rel (0) target = $region9
    $region8: #{tpu_custom_call.1} parent=1 // pred_region
      %s32 = ssub.s32 512, 512
      %33 = vsyncadd [#allocation7], %s32
      %s34 = sshll.u32 [#allocation6], 4
      %s35 = int_to_ptr.vmem [resolvable:$true] %s34
      %40 = dma.hbm_to_vmem [thread:$0]  %s1, 512, %s35, [#allocation7], 64, 64, 4
    $region9: #{tpu_custom_call.1} parent=1 // pred_fallthru
      _
    // Predicated region
    $region10: #{tpu_custom_call.1} parent=1 // pred_check
      _
    $region11: #{tpu_custom_call.1} parent=1 // pred_check_branch
      %42 = sbr.rel (0) target = $region13
    $region12: #{tpu_custom_call.1} parent=1 // pred_region
      %s44 = ssub.s32 512, 512
      %45 = vsyncadd [#allocation7], %s44
      %s46 = sshll.u32 [#allocation8], 4
      %s47 = int_to_ptr.vmem [resolvable:$true] %s46
      %52 = dma.hbm_to_vmem [thread:$0]  %s2, 512, %s47, [#allocation7], 64, 64, 4
    $region13: #{tpu_custom_call.1} parent=1 // pred_fallthru
      _
    // Predicated region
    $region14: #{tpu_custom_call.1} parent=1 // pred_check
      _
    $region15: #{tpu_custom_call.1} parent=1 // pred_check_branch
      %54 = sbr.rel (0) target = $region17
    $region16: #{tpu_custom_call.1} parent=1 // pred_region
      %s56 = ssub.s32 1024, 1024
      %57 = vsyncadd [#allocation10], %s56
      %s58 = sshll.u32 [#allocation9], 4
      %s59 = int_to_ptr.vmem [resolvable:$true] %s58
      %64 = dma.hbm_to_vmem [thread:$0]  %s3, 1024, %s59, [#allocation10], 64, 64, 4
    $region17: #{tpu_custom_call.1} parent=1 // pred_fallthru
      _
    // Predicated region
    $region18: #{tpu_custom_call.1} parent=1 // pred_check
      _
    $region19: #{tpu_custom_call.1} parent=1 // pred_check_branch
      %66 = sbr.rel (0) target = $region21
    $region20: #{tpu_custom_call.1} parent=1 // pred_region
      %s68 = ssub.s32 1024, 1024
      %69 = vsyncadd [#allocation10], %s68
      %s70 = sshll.u32 [#allocation11], 4
      %s71 = int_to_ptr.vmem [resolvable:$true] %s70
      %76 = dma.hbm_to_vmem [thread:$0]  %s4, 1024, %s71, [#allocation10], 64, 64, 4
    $region21: #{tpu_custom_call.1} parent=1 // pred_fallthru
      _
    // Predicated region
    $region22: #{tpu_custom_call.1} parent=1 // pred_check
      _
    $region23: #{tpu_custom_call.1} parent=1 // pred_check_branch
      %78 = sbr.rel (0) target = $region25
    $region24: #{tpu_custom_call.1} parent=1 // pred_region
      %s80 = ssub.s32 1024, 1024
      %81 = vsyncadd [#allocation13], %s80
      %s82 = sshll.u32 [#allocation12], 4
      %s83 = int_to_ptr.vmem [resolvable:$true] %s82
      %88 = dma.hbm_to_vmem [thread:$0]  %s5, 1024, %s83, [#allocation13], 64, 64, 4
    $region25: #{tpu_custom_call.1} parent=1 // pred_fallthru
      _
    // Predicated region
    $region26: #{tpu_custom_call.1} parent=1 // pred_check
      _
    $region27: #{tpu_custom_call.1} parent=1 // pred_check_branch
      %90 = sbr.rel (0) target = $region29
    $region28: #{tpu_custom_call.1} parent=1 // pred_region
      _
    $region29: #{tpu_custom_call.1} parent=1 // pred_fallthru
      _
    // Predicated region
    $region30: #{tpu_custom_call.1} parent=1 // pred_check
      _
    $region31: #{tpu_custom_call.1} parent=1 // pred_check_branch
      %92 = sbr.rel (0) target = $region33
    $region32: #{tpu_custom_call.1} parent=1 // pred_region
      %93 = dma.done [#allocation4], 1024
    $region33: #{tpu_custom_call.1} parent=1 // pred_fallthru
      _
    // Predicated region
    $region34: #{tpu_custom_call.1} parent=1 // pred_check
      _
    $region35: #{tpu_custom_call.1} parent=1 // pred_check_branch
      %95 = sbr.rel (0) target = $region37
    $region36: #{tpu_custom_call.1} parent=1 // pred_region
      %96 = dma.done [#allocation7], 512
    $region37: #{tpu_custom_call.1} parent=1 // pred_fallthru
      _
    // Predicated region
    $region38: #{tpu_custom_call.1} parent=1 // pred_check
      _
    $region39: #{tpu_custom_call.1} parent=1 // pred_check_branch
      %98 = sbr.rel (0) target = $region41
    $region40: #{tpu_custom_call.1} parent=1 // pred_region
      %99 = dma.done [#allocation7], 512
    $region41: #{tpu_custom_call.1} parent=1 // pred_fallthru
      _
    // Predicated region
    $region42: #{tpu_custom_call.1} parent=1 // pred_check
      _
    $region43: #{tpu_custom_call.1} parent=1 // pred_check_branch
      %101 = sbr.rel (0) target = $region45
    $region44: #{tpu_custom_call.1} parent=1 // pred_region
      %102 = dma.done [#allocation10], 1024
    $region45: #{tpu_custom_call.1} parent=1 // pred_fallthru
      _
    // Predicated region
    $region46: #{tpu_custom_call.1} parent=1 // pred_check
      _
    $region47: #{tpu_custom_call.1} parent=1 // pred_check_branch
      %104 = sbr.rel (0) target = $region49
    $region48: #{tpu_custom_call.1} parent=1 // pred_region
      %105 = dma.done [#allocation10], 1024
    $region49: #{tpu_custom_call.1} parent=1 // pred_fallthru
      _
    // Predicated region
    $region50: #{tpu_custom_call.1} parent=1 // pred_check
      _
    $region51: #{tpu_custom_call.1} parent=1 // pred_check_branch
      %107 = sbr.rel (0) target = $region53
    $region52: #{tpu_custom_call.1} parent=1 // pred_region
      %108 = dma.done [#allocation13], 1024
    $region53: #{tpu_custom_call.1} parent=1 // pred_fallthru
      _
    %v110 = vld [vmem:[%s6] sm:$0x1]
    %v111 = vld [vmem:[%s6 + $0x1] sm:$0x1]
    %v112 = vld [vmem:[%s6 + $0x2] sm:$0x1]
    %v113 = vld [vmem:[%s6 + $0x3] sm:$0x1]
    %v114 = vld [vmem:[%s6 + $0x4] sm:$0x1]
    %v115 = vld [vmem:[#allocation3] sm:$0xf]
    %v116 = vld [vmem:[#allocation3 + $0x4] sm:$0xf]
    %v117 = vld [vmem:[#allocation3 + $0x8] sm:$0xf]
    %v118 = vld [vmem:[#allocation3 + $0xc] sm:$0xf]
    %v119 = vld [vmem:[#allocation3 + $0x10] sm:$0xf]
    %v120 = vld [vmem:[#allocation3 + $0x14] sm:$0xf]
    %v121 = vld [vmem:[#allocation3 + $0x18] sm:$0xf]
    %v122 = vld [vmem:[#allocation3 + $0x1c] sm:$0xf]
    %v123 = vld [vmem:[#allocation3 + $0x20] sm:$0xf]
    %v124 = vld [vmem:[#allocation3 + $0x24] sm:$0xf]
    %v125 = vld [vmem:[#allocation3 + $0x28] sm:$0xf]
    %v126 = vld [vmem:[#allocation3 + $0x2c] sm:$0xf]
    %v127 = vld [vmem:[#allocation3 + $0x30] sm:$0xf]
    %v128 = vld [vmem:[#allocation3 + $0x34] sm:$0xf]
    %v129 = vld [vmem:[#allocation3 + $0x38] sm:$0xf]
    %v130 = vld [vmem:[#allocation3 + $0x3c] sm:$0xf]
    %v131 = vld [vmem:[#allocation9] sm:$0xf]
    %v132 = vld [vmem:[#allocation9 + $0x4] sm:$0xf]
    %v133 = vld [vmem:[#allocation9 + $0x8] sm:$0xf]
    %v134 = vld [vmem:[#allocation9 + $0xc] sm:$0xf]
    %v135 = vld [vmem:[#allocation9 + $0x10] sm:$0xf]
    %v136 = vld [vmem:[#allocation9 + $0x14] sm:$0xf]
    %v137 = vld [vmem:[#allocation9 + $0x18] sm:$0xf]
    %v138 = vld [vmem:[#allocation9 + $0x1c] sm:$0xf]
    %v139 = vld [vmem:[#allocation9 + $0x20] sm:$0xf]
    %v140 = vld [vmem:[#allocation9 + $0x24] sm:$0xf]
    %v141 = vld [vmem:[#allocation9 + $0x28] sm:$0xf]
    %v142 = vld [vmem:[#allocation9 + $0x2c] sm:$0xf]
    %v143 = vld [vmem:[#allocation9 + $0x30] sm:$0xf]
    %v144 = vld [vmem:[#allocation9 + $0x34] sm:$0xf]
    %v145 = vld [vmem:[#allocation9 + $0x38] sm:$0xf]
    %v146 = vld [vmem:[#allocation9 + $0x3c] sm:$0xf]
    %v163 = vunpack.c.l.b16 %v115
    %v164 = vunpack.c.l.b16 %v116
    %v165 = vunpack.c.l.b16 %v117
    %v166 = vunpack.c.l.b16 %v118
    %v167 = vunpack.c.l.b16 %v119
    %v168 = vunpack.c.l.b16 %v120
    %v169 = vunpack.c.l.b16 %v121
    %v170 = vunpack.c.l.b16 %v122
    %v171 = vunpack.c.l.b16 %v123
    %v172 = vunpack.c.l.b16 %v124
    %v173 = vunpack.c.l.b16 %v125
    %v174 = vunpack.c.l.b16 %v126
    %v175 = vunpack.c.l.b16 %v127
    %v176 = vunpack.c.l.b16 %v128
    %v177 = vunpack.c.l.b16 %v129
    %v178 = vunpack.c.l.b16 %v130
    %v179 = vpack.c.b16 %v164, %v163
    %v180 = vpack.c.b16 %v166, %v165
    %v181 = vpack.c.b16 %v168, %v167
    %v182 = vpack.c.b16 %v170, %v169
    %v183 = vpack.c.b16 %v172, %v171
    %v184 = vpack.c.b16 %v174, %v173
    %v185 = vpack.c.b16 %v176, %v175
    %v186 = vpack.c.b16 %v178, %v177
    %v211 = vunpack.c.l.b16 %v131
    %v212 = vunpack.c.l.b16 %v132
    %v213 = vunpack.c.l.b16 %v133
    %v214 = vunpack.c.l.b16 %v134
    %v215 = vunpack.c.l.b16 %v135
    %v216 = vunpack.c.l.b16 %v136
    %v217 = vunpack.c.l.b16 %v137
    %v218 = vunpack.c.l.b16 %v138
    %v219 = vunpack.c.l.b16 %v139
    %v220 = vunpack.c.l.b16 %v140
    %v221 = vunpack.c.l.b16 %v141
    %v222 = vunpack.c.l.b16 %v142
    %v223 = vunpack.c.l.b16 %v143
    %v224 = vunpack.c.l.b16 %v144
    %v225 = vunpack.c.l.b16 %v145
    %v226 = vunpack.c.l.b16 %v146
    %v227 = vpack.c.b16 %v212, %v211
    %v228 = vpack.c.b16 %v214, %v213
    %v229 = vpack.c.b16 %v216, %v215
    %v230 = vpack.c.b16 %v218, %v217
    %v231 = vpack.c.b16 %v220, %v219
    %v232 = vpack.c.b16 %v222, %v221
    %v233 = vpack.c.b16 %v224, %v223
    %v234 = vpack.c.b16 %v226, %v225
    %243 = vmatprep.subr.bf16.mxu0 0
    %244 = vmatpush1.bf16.msra.mxu0 %v234
    %245 = vmatprep.subr.bf16.mxu0 0
    %246 = vmatpush1.bf16.msra.mxu0 %v233
    %247 = vmatprep.subr.bf16.mxu0 0
    %248 = vmatpush1.bf16.msra.mxu0 %v232
    %249 = vmatprep.subr.bf16.mxu0 0
    %250 = vmatpush1.bf16.msra.mxu0 %v231
    %251 = vmatprep.subr.bf16.mxu0 0
    %252 = vmatpush1.bf16.msra.mxu0 %v230
    %253 = vmatprep.subr.bf16.mxu0 0
    %254 = vmatpush1.bf16.msra.mxu0 %v229
    %255 = vmatprep.subr.bf16.mxu0 0
    %256 = vmatpush1.bf16.msra.mxu0 %v228
    %257 = vmatprep.subr.bf16.mxu0 0
    %258 = vmatpush1.bf16.msra.mxu0 %v227
    %259 = vmatprep.subr.bf16.mxu0 0
    %260 = vmatpush2.bf16.msra.mxu0 0
    %261 = vmatprep.subr.bf16.mxu0 0
    %262 = vmatpush2.bf16.msra.mxu0 0
    %263 = vmatprep.subr.bf16.mxu0 0
    %264 = vmatpush2.bf16.msra.mxu0 0
    %265 = vmatprep.subr.bf16.mxu0 0
    %266 = vmatpush2.bf16.msra.mxu0 0
    %267 = vmatprep.subr.bf16.mxu0 0
    %268 = vmatpush2.bf16.msra.mxu0 0
    %269 = vmatprep.subr.bf16.mxu0 0
    %270 = vmatpush2.bf16.msra.mxu0 0
    %271 = vmatprep.subr.bf16.mxu0 0
    %272 = vmatpush2.bf16.msra.mxu0 0
    %273 = vmatprep.subr.bf16.mxu0 0
    %274 = vmatpush2.bf16.msra.mxu0 0
    %275 = vmatprep.mubr.bf16.mxu0 0
    %276 = vmatmul.mubr.bf16.gmra.mxu0 %v179
    %v277 = vpop.f32.mrf.mxu0
    %v278 = vadd.f32 0.0, %v277
    %v279 = vpop.f32.mrf.mxu0
    %v280 = vpop.f32.mrf.mxu0
    %v281 = vadd.f32 0.0, %v280
    %v282 = vpop.f32.mrf.mxu0
    %283 = vmatprep.mubr.bf16.mxu0 0
    %284 = vmatmul.mubr.bf16.gmra.mxu0 %v180
    %v285 = vpop.f32.mrf.mxu0
    %v286 = vadd.f32 0.0, %v285
    %v287 = vpop.f32.mrf.mxu0
    %v288 = vpop.f32.mrf.mxu0
    %v289 = vadd.f32 0.0, %v288
    %v290 = vpop.f32.mrf.mxu0
    %291 = vmatprep.mubr.bf16.mxu0 0
    %292 = vmatmul.mubr.bf16.gmra.mxu0 %v181
    %v293 = vpop.f32.mrf.mxu0
    %v294 = vadd.f32 0.0, %v293
    %v295 = vpop.f32.mrf.mxu0
    %v296 = vpop.f32.mrf.mxu0
    %v297 = vadd.f32 0.0, %v296
    %v298 = vpop.f32.mrf.mxu0
    %299 = vmatprep.mubr.bf16.mxu0 0
    %300 = vmatmul.mubr.bf16.gmra.mxu0 %v182
    %v301 = vpop.f32.mrf.mxu0
    %v302 = vadd.f32 0.0, %v301
    %v303 = vpop.f32.mrf.mxu0
    %v304 = vpop.f32.mrf.mxu0
    %v305 = vadd.f32 0.0, %v304
    %v306 = vpop.f32.mrf.mxu0
    %307 = vmatprep.mubr.bf16.mxu0 0
    %308 = vmatmul.mubr.bf16.gmra.mxu0 %v183
    %v309 = vpop.f32.mrf.mxu0
    %v310 = vadd.f32 0.0, %v309
    %v311 = vpop.f32.mrf.mxu0
    %v312 = vpop.f32.mrf.mxu0
    %v313 = vadd.f32 0.0, %v312
    %v314 = vpop.f32.mrf.mxu0
    %315 = vmatprep.mubr.bf16.mxu0 0
    %316 = vmatmul.mubr.bf16.gmra.mxu0 %v184
    %v317 = vpop.f32.mrf.mxu0
    %v318 = vadd.f32 0.0, %v317
    %v319 = vpop.f32.mrf.mxu0
    %v320 = vpop.f32.mrf.mxu0
    %v321 = vadd.f32 0.0, %v320
    %v322 = vpop.f32.mrf.mxu0
    %323 = vmatprep.mubr.bf16.mxu0 0
    %324 = vmatmul.mubr.bf16.gmra.mxu0 %v185
    %v325 = vpop.f32.mrf.mxu0
    %v326 = vadd.f32 0.0, %v325
    %v327 = vpop.f32.mrf.mxu0
    %v328 = vpop.f32.mrf.mxu0
    %v329 = vadd.f32 0.0, %v328
    %v330 = vpop.f32.mrf.mxu0
    %331 = vmatprep.mubr.bf16.mxu0 0
    %332 = vmatmul.mubr.bf16.gmra.mxu0 %v186
    %v333 = vpop.f32.mrf.mxu0
    %v334 = vadd.f32 0.0, %v333
    %v335 = vpop.f32.mrf.mxu0
    %v336 = vpop.f32.mrf.mxu0
    %v337 = vadd.f32 0.0, %v336
    %v338 = vpop.f32.mrf.mxu0
    %339 = vdwg.mxu0
    %v340 = vpack.c.bf16 %v281, %v278
    %v341 = vpack.c.bf16 %v289, %v286
    %v342 = vpack.c.bf16 %v297, %v294
    %v343 = vpack.c.bf16 %v305, %v302
    %v344 = vpack.c.bf16 %v313, %v310
    %v345 = vpack.c.bf16 %v321, %v318
    %v346 = vpack.c.bf16 %v329, %v326
    %v347 = vpack.c.bf16 %v337, %v334
    %v348 = vpack.c.bf16 %v110, %v110
    %349 = vmatprep.subr.bf16.mxu0 0
    %350 = vmatpush1.bf16.xpose.msra.mxu0 %v347
    %351 = vmatprep.subr.bf16.mxu0 0
    %352 = vmatpush1.bf16.xpose.msra.mxu0 %v346
    %353 = vmatprep.subr.bf16.mxu0 0
    %354 = vmatpush1.bf16.xpose.msra.mxu0 %v345
    %355 = vmatprep.subr.bf16.mxu0 0
    %356 = vmatpush1.bf16.xpose.msra.mxu0 %v344
    %357 = vmatprep.subr.bf16.mxu0 0
    %358 = vmatpush1.bf16.xpose.msra.mxu0 %v343
    %359 = vmatprep.subr.bf16.mxu0 0
    %360 = vmatpush1.bf16.xpose.msra.mxu0 %v342
    %361 = vmatprep.subr.bf16.mxu0 0
    %362 = vmatpush1.bf16.xpose.msra.mxu0 %v341
    %363 = vmatprep.subr.bf16.mxu0 0
    %364 = vmatpush1.bf16.xpose.msra.mxu0 %v340
    %365 = vmatprep.subr.bf16.mxu0 0
    %366 = vmatpush2.bf16.xpose.msra.mxu0 0
    %367 = vmatprep.subr.bf16.mxu0 0
    %368 = vmatpush2.bf16.xpose.msra.mxu0 0
    %369 = vmatprep.subr.bf16.mxu0 0
    %370 = vmatpush2.bf16.xpose.msra.mxu0 0
    %371 = vmatprep.subr.bf16.mxu0 0
    %372 = vmatpush2.bf16.xpose.msra.mxu0 0
    %373 = vmatprep.subr.bf16.mxu0 0
    %374 = vmatpush2.bf16.xpose.msra.mxu0 0
    %375 = vmatprep.subr.bf16.mxu0 0
    %376 = vmatpush2.bf16.xpose.msra.mxu0 0
    %377 = vmatprep.subr.bf16.mxu0 0
    %378 = vmatpush2.bf16.xpose.msra.mxu0 0
    %379 = vmatprep.subr.bf16.mxu0 0
    %380 = vmatpush2.bf16.xpose.msra.mxu0 0
    %381 = vmatprep.mubr.bf16.mxu0 0
    %382 = vmatmul.mubr.bf16.gmra.mxu0 %v348
    %v383 = vpop.f32.mrf.mxu0
    %v384 = vadd.f32 0.0, %v383
    %v385 = vpop.f32.mrf.mxu0
    %v386 = vpop.f32.mrf.mxu0
    %v387 = vpop.f32.mrf.mxu0
    %388 = vdwg.mxu0
    %390 = vset.pattern.permute.xlu0 127
    %391 = vperm.xlu0 %390, %v278
    %v392 = vpop.permute.xlu0 %391
    %395 = vset.pattern.permute.xlu0 127
    %396 = vperm.xlu0 %395, %v281
    %v397 = vpop.permute.xlu0 %396
    %400 = vset.pattern.permute.xlu0 127
    %401 = vperm.xlu0 %400, %v286
    %v402 = vpop.permute.xlu0 %401
    %405 = vset.pattern.permute.xlu0 127
    %406 = vperm.xlu0 %405, %v289
    %v407 = vpop.permute.xlu0 %406
    %410 = vset.pattern.permute.xlu0 127
    %411 = vperm.xlu0 %410, %v294
    %v412 = vpop.permute.xlu0 %411
    %415 = vset.pattern.permute.xlu0 127
    %416 = vperm.xlu0 %415, %v297
    %v417 = vpop.permute.xlu0 %416
    %420 = vset.pattern.permute.xlu0 127
    %421 = vperm.xlu0 %420, %v302
    %v422 = vpop.permute.xlu0 %421
    %425 = vset.pattern.permute.xlu0 127
    %426 = vperm.xlu0 %425, %v305
    %v427 = vpop.permute.xlu0 %426
    %v429 = vlaneseq
    %v430 = vshrl.u32 %v429, 7
    %v431 = vsub.s32 0, %v430
    %v432 = vrot.slane %v384, %v431
    %v433 = vadd.f32 %v392, %v432
    %v434 = vadd.f32 %v397, %v432
    %v435 = vadd.f32 %v402, %v432
    %v436 = vadd.f32 %v407, %v432
    %v437 = vadd.f32 %v412, %v432
    %v438 = vadd.f32 %v417, %v432
    %v439 = vadd.f32 %v422, %v432
    %v440 = vadd.f32 %v427, %v432
    %v441 = vld [vmem:[#allocation6] sm:$0xf]
    %v442 = vld [vmem:[#allocation6 + $0x4] sm:$0xf]
    %v443 = vld [vmem:[#allocation6 + $0x8] sm:$0xf]
    %v444 = vld [vmem:[#allocation6 + $0xc] sm:$0xf]
    %v445 = vld [vmem:[#allocation6 + $0x10] sm:$0xf]
    %v446 = vld [vmem:[#allocation6 + $0x14] sm:$0xf]
    %v447 = vld [vmem:[#allocation6 + $0x18] sm:$0xf]
    %v448 = vld [vmem:[#allocation6 + $0x1c] sm:$0xf]
    %v449 = vunpack.c.l.bf16 %v441
    %v450 = vunpack.c.l.bf16 %v442
    %v451 = vunpack.c.l.bf16 %v443
    %v452 = vunpack.c.l.bf16 %v444
    %v453 = vunpack.c.l.bf16 %v445
    %v454 = vunpack.c.l.bf16 %v446
    %v455 = vunpack.c.l.bf16 %v447
    %v456 = vunpack.c.l.bf16 %v448
    %v457 = vadd.f32 %v433, %v449
    %v458 = vadd.f32 %v434, %v450
    %v459 = vadd.f32 %v435, %v451
    %v460 = vadd.f32 %v436, %v452
    %v461 = vadd.f32 %v437, %v453
    %v462 = vadd.f32 %v438, %v454
    %v463 = vadd.f32 %v439, %v455
    %v464 = vadd.f32 %v440, %v456
    %v465 = vmul.f32 %v457, 0.2
    %v466 = vmul.f32 %v458, 0.2
    %v467 = vmul.f32 %v459, 0.2
    %v468 = vmul.f32 %v460, 0.2
    %v469 = vmul.f32 %v461, 0.2
    %v470 = vmul.f32 %v462, 0.2
    %v471 = vmul.f32 %v463, 0.2
    %v472 = vmul.f32 %v464, 0.2
    %v473 = vmax.f32 %v457, %v465
    %v474 = vmax.f32 %v458, %v466
    %v475 = vmax.f32 %v459, %v467
    %v476 = vmax.f32 %v460, %v468
    %v477 = vmax.f32 %v461, %v469
    %v478 = vmax.f32 %v462, %v470
    %v479 = vmax.f32 %v463, %v471
    %v480 = vmax.f32 %v464, %v472
    %481 = vmax.xlane.f32.xlu0 %v473
    %v482 = vpop.xlane.xlu0 %481
    %483 = vmax.xlane.f32.xlu0 %v474
    %v484 = vpop.xlane.xlu0 %483
    %485 = vmax.xlane.f32.xlu0 %v475
    %v486 = vpop.xlane.xlu0 %485
    %487 = vmax.xlane.f32.xlu0 %v476
    %v488 = vpop.xlane.xlu0 %487
    %489 = vmax.xlane.f32.xlu0 %v477
    %v490 = vpop.xlane.xlu0 %489
    %491 = vmax.xlane.f32.xlu0 %v478
    %v492 = vpop.xlane.xlu0 %491
    %493 = vmax.xlane.f32.xlu0 %v479
    %v494 = vpop.xlane.xlu0 %493
    %495 = vmax.xlane.f32.xlu0 %v480
    %v496 = vpop.xlane.xlu0 %495
    %v497 = vsub.f32 %v473, %v482
    %v498 = vsub.f32 %v474, %v484
    %v499 = vsub.f32 %v475, %v486
    %v500 = vsub.f32 %v476, %v488
    %v501 = vsub.f32 %v477, %v490
    %v502 = vsub.f32 %v478, %v492
    %v503 = vsub.f32 %v479, %v494
    %v504 = vsub.f32 %v480, %v496
    %v505 = vmul.f32 %v497, 1.442695
    %v506 = vpow.pop %v505
    %v507 = vmul.f32 %v498, 1.442695
    %v508 = vpow.pop %v507
    %v509 = vmul.f32 %v499, 1.442695
    %v510 = vpow.pop %v509
    %v511 = vmul.f32 %v500, 1.442695
    %v512 = vpow.pop %v511
    %v513 = vmul.f32 %v501, 1.442695
    %v514 = vpow.pop %v513
    %v515 = vmul.f32 %v502, 1.442695
    %v516 = vpow.pop %v515
    %v517 = vmul.f32 %v503, 1.442695
    %v518 = vpow.pop %v517
    %v519 = vmul.f32 %v504, 1.442695
    %v520 = vpow.pop %v519
    %521 = vadd.xlane.f32.xlu0 %v506
    %v522 = vpop.xlane.xlu0 %521
    %523 = vadd.xlane.f32.xlu0 %v508
    %v524 = vpop.xlane.xlu0 %523
    %525 = vadd.xlane.f32.xlu0 %v510
    %v526 = vpop.xlane.xlu0 %525
    %527 = vadd.xlane.f32.xlu0 %v512
    %v528 = vpop.xlane.xlu0 %527
    %529 = vadd.xlane.f32.xlu0 %v514
    %v530 = vpop.xlane.xlu0 %529
    %531 = vadd.xlane.f32.xlu0 %v516
    %v532 = vpop.xlane.xlu0 %531
    %533 = vadd.xlane.f32.xlu0 %v518
    %v534 = vpop.xlane.xlu0 %533
    %535 = vadd.xlane.f32.xlu0 %v520
    %v536 = vpop.xlane.xlu0 %535
    %v537 = vrcp.pop %v522
    %v538 = vrcp.pop %v524
    %v539 = vrcp.pop %v526
    %v540 = vrcp.pop %v528
    %v541 = vrcp.pop %v530
    %v542 = vrcp.pop %v532
    %v543 = vrcp.pop %v534
    %v544 = vrcp.pop %v536
    %v545 = vpack.c.bf16 %v508, %v506
    %v546 = vpack.c.bf16 %v512, %v510
    %v547 = vpack.c.bf16 %v516, %v514
    %v548 = vpack.c.bf16 %v520, %v518
    %549 = vmatprep.subr.bf16.mxu0 0
    %550 = vmatpush1.bf16.msra.mxu0 %v347
    %551 = vmatprep.subr.bf16.mxu0 0
    %552 = vmatpush1.bf16.msra.mxu0 %v346
    %553 = vmatprep.subr.bf16.mxu0 0
    %554 = vmatpush1.bf16.msra.mxu0 %v345
    %555 = vmatprep.subr.bf16.mxu0 0
    %556 = vmatpush1.bf16.msra.mxu0 %v344
    %557 = vmatprep.subr.bf16.mxu0 0
    %558 = vmatpush1.bf16.msra.mxu0 %v343
    %559 = vmatprep.subr.bf16.mxu0 0
    %560 = vmatpush1.bf16.msra.mxu0 %v342
    %561 = vmatprep.subr.bf16.mxu0 0
    %562 = vmatpush1.bf16.msra.mxu0 %v341
    %563 = vmatprep.subr.bf16.mxu0 0
    %564 = vmatpush1.bf16.msra.mxu0 %v340
    %565 = vmatprep.subr.bf16.mxu0 0
    %566 = vmatpush2.bf16.msra.mxu0 0
    %567 = vmatprep.subr.bf16.mxu0 0
    %568 = vmatpush2.bf16.msra.mxu0 0
    %569 = vmatprep.subr.bf16.mxu0 0
    %570 = vmatpush2.bf16.msra.mxu0 0
    %571 = vmatprep.subr.bf16.mxu0 0
    %572 = vmatpush2.bf16.msra.mxu0 0
    %573 = vmatprep.subr.bf16.mxu0 0
    %574 = vmatpush2.bf16.msra.mxu0 0
    %575 = vmatprep.subr.bf16.mxu0 0
    %576 = vmatpush2.bf16.msra.mxu0 0
    %577 = vmatprep.subr.bf16.mxu0 0
    %578 = vmatpush2.bf16.msra.mxu0 0
    %579 = vmatprep.subr.bf16.mxu0 0
    %580 = vmatpush2.bf16.msra.mxu0 0
    %581 = vmatprep.mubr.bf16.mxu0 0
    %582 = vmatmul.mubr.bf16.gmra.mxu0 %v545
    %v583 = vpop.f32.mrf.mxu0
    %v584 = vadd.f32 0.0, %v583
    %v585 = vpop.f32.mrf.mxu0
    %v586 = vpop.f32.mrf.mxu0
    %v587 = vadd.f32 0.0, %v586
    %v588 = vpop.f32.mrf.mxu0
    %589 = vmatprep.mubr.bf16.mxu0 0
    %590 = vmatmul.mubr.bf16.gmra.mxu0 %v546
    %v591 = vpop.f32.mrf.mxu0
    %v592 = vadd.f32 0.0, %v591
    %v593 = vpop.f32.mrf.mxu0
    %v594 = vpop.f32.mrf.mxu0
    %v595 = vadd.f32 0.0, %v594
    %v596 = vpop.f32.mrf.mxu0
    %597 = vmatprep.mubr.bf16.mxu0 0
    %598 = vmatmul.mubr.bf16.gmra.mxu0 %v547
    %v599 = vpop.f32.mrf.mxu0
    %v600 = vadd.f32 0.0, %v599
    %v601 = vpop.f32.mrf.mxu0
    %v602 = vpop.f32.mrf.mxu0
    %v603 = vadd.f32 0.0, %v602
    %v604 = vpop.f32.mrf.mxu0
    %605 = vmatprep.mubr.bf16.mxu0 0
    %606 = vmatmul.mubr.bf16.gmra.mxu0 %v548
    %v607 = vpop.f32.mrf.mxu0
    %v608 = vadd.f32 0.0, %v607
    %v609 = vpop.f32.mrf.mxu0
    %v610 = vpop.f32.mrf.mxu0
    %v611 = vadd.f32 0.0, %v610
    %v612 = vpop.f32.mrf.mxu0
    %613 = vdwg.mxu0
    %v614 = vmul.f32 %v584, %v537
    %v615 = vmul.f32 %v587, %v538
    %v616 = vmul.f32 %v592, %v539
    %v617 = vmul.f32 %v595, %v540
    %v618 = vmul.f32 %v600, %v541
    %v619 = vmul.f32 %v603, %v542
    %v620 = vmul.f32 %v608, %v543
    %v621 = vmul.f32 %v611, %v544
    %v622 = vlaneseq
    %v623 = vshrl.u32 %v622, 7
    %v624 = vsub.s32 0, %v623
    %v625 = vrot.slane %v111, %v624
    %v626 = vadd.f32 %v614, %v625
    %v627 = vadd.f32 %v615, %v625
    %v628 = vadd.f32 %v616, %v625
    %v629 = vadd.f32 %v617, %v625
    %v630 = vadd.f32 %v618, %v625
    %v631 = vadd.f32 %v619, %v625
    %v632 = vadd.f32 %v620, %v625
    %v633 = vadd.f32 %v621, %v625
    %v634 = vmax.f32 %v626, 0.0
    %v635 = vmax.f32 %v627, 0.0
    %v636 = vmax.f32 %v628, 0.0
    %v637 = vmax.f32 %v629, 0.0
    %v638 = vmax.f32 %v630, 0.0
    %v639 = vmax.f32 %v631, 0.0
    %v640 = vmax.f32 %v632, 0.0
    %v641 = vmax.f32 %v633, 0.0
    %v642 = vpack.c.bf16 %v635, %v634
    %v643 = vpack.c.bf16 %v637, %v636
    %v644 = vpack.c.bf16 %v639, %v638
    %v645 = vpack.c.bf16 %v641, %v640
    %v650 = vunpack.c.l.b16 %v642
    %v651 = vunpack.c.h.b16 %v642
    %v652 = vunpack.c.l.b16 %v643
    %v653 = vunpack.c.h.b16 %v643
    %v654 = vunpack.c.l.b16 %v644
    %v655 = vunpack.c.h.b16 %v644
    %v656 = vunpack.c.l.b16 %v645
    %v657 = vunpack.c.h.b16 %v645
    %v658 = vpack.c.b16 %v650, %v650
    %v659 = vpack.c.b16 %v651, %v651
    %v660 = vpack.c.b16 %v652, %v652
    %v661 = vpack.c.b16 %v653, %v653
    %v662 = vpack.c.b16 %v654, %v654
    %v663 = vpack.c.b16 %v655, %v655
    %v664 = vpack.c.b16 %v656, %v656
    %v665 = vpack.c.b16 %v657, %v657
    %674 = vst [vmem:[#allocation2] sm:$0xf] %v658
    %675 = vst [vmem:[#allocation2 + $0x4] sm:$0xf] %v659
    %676 = vst [vmem:[#allocation2 + $0x8] sm:$0xf] %v660
    %677 = vst [vmem:[#allocation2 + $0xc] sm:$0xf] %v661
    %678 = vst [vmem:[#allocation2 + $0x10] sm:$0xf] %v662
    %679 = vst [vmem:[#allocation2 + $0x14] sm:$0xf] %v663
    %680 = vst [vmem:[#allocation2 + $0x18] sm:$0xf] %v664
    %681 = vst [vmem:[#allocation2 + $0x1c] sm:$0xf] %v665
    %682 = vst [vmem:[#allocation2 + $0x20] sm:$0xf] 0
    %683 = vst [vmem:[#allocation2 + $0x24] sm:$0xf] 0
    %684 = vst [vmem:[#allocation2 + $0x28] sm:$0xf] 0
    %685 = vst [vmem:[#allocation2 + $0x2c] sm:$0xf] 0
    %686 = vst [vmem:[#allocation2 + $0x30] sm:$0xf] 0
    %687 = vst [vmem:[#allocation2 + $0x34] sm:$0xf] 0
    %688 = vst [vmem:[#allocation2 + $0x38] sm:$0xf] 0
    %689 = vst [vmem:[#allocation2 + $0x3c] sm:$0xf] 0
    %v690 = vld [vmem:[#allocation2] sm:$0xf]
    %v691 = vld [vmem:[#allocation2 + $0x4] sm:$0xf]
    %v692 = vld [vmem:[#allocation2 + $0x8] sm:$0xf]
    %v693 = vld [vmem:[#allocation2 + $0xc] sm:$0xf]
    %v694 = vld [vmem:[#allocation2 + $0x10] sm:$0xf]
    %v695 = vld [vmem:[#allocation2 + $0x14] sm:$0xf]
    %v696 = vld [vmem:[#allocation2 + $0x18] sm:$0xf]
    %v697 = vld [vmem:[#allocation2 + $0x1c] sm:$0xf]
    %v698 = vld [vmem:[#allocation2 + $0x20] sm:$0xf]
    %v699 = vld [vmem:[#allocation2 + $0x24] sm:$0xf]
    %v700 = vld [vmem:[#allocation2 + $0x28] sm:$0xf]
    %v701 = vld [vmem:[#allocation2 + $0x2c] sm:$0xf]
    %v702 = vld [vmem:[#allocation2 + $0x30] sm:$0xf]
    %v703 = vld [vmem:[#allocation2 + $0x34] sm:$0xf]
    %v704 = vld [vmem:[#allocation2 + $0x38] sm:$0xf]
    %v705 = vld [vmem:[#allocation2 + $0x3c] sm:$0xf]
    %v706 = vld [vmem:[#allocation11] sm:$0xf]
    %v707 = vld [vmem:[#allocation11 + $0x4] sm:$0xf]
    %v708 = vld [vmem:[#allocation11 + $0x8] sm:$0xf]
    %v709 = vld [vmem:[#allocation11 + $0xc] sm:$0xf]
    %v710 = vld [vmem:[#allocation11 + $0x10] sm:$0xf]
    %v711 = vld [vmem:[#allocation11 + $0x14] sm:$0xf]
    %v712 = vld [vmem:[#allocation11 + $0x18] sm:$0xf]
    %v713 = vld [vmem:[#allocation11 + $0x1c] sm:$0xf]
    %v714 = vld [vmem:[#allocation11 + $0x20] sm:$0xf]
    %v715 = vld [vmem:[#allocation11 + $0x24] sm:$0xf]
    %v716 = vld [vmem:[#allocation11 + $0x28] sm:$0xf]
    %v717 = vld [vmem:[#allocation11 + $0x2c] sm:$0xf]
    %v718 = vld [vmem:[#allocation11 + $0x30] sm:$0xf]
    %v719 = vld [vmem:[#allocation11 + $0x34] sm:$0xf]
    %v720 = vld [vmem:[#allocation11 + $0x38] sm:$0xf]
    %v721 = vld [vmem:[#allocation11 + $0x3c] sm:$0xf]
    %v738 = vunpack.c.l.b16 %v690
    %v739 = vunpack.c.l.b16 %v691
    %v740 = vunpack.c.l.b16 %v692
    %v741 = vunpack.c.l.b16 %v693
    %v742 = vunpack.c.l.b16 %v694
    %v743 = vunpack.c.l.b16 %v695
    %v744 = vunpack.c.l.b16 %v696
    %v745 = vunpack.c.l.b16 %v697
    %v746 = vunpack.c.l.b16 %v698
    %v747 = vunpack.c.l.b16 %v699
    %v748 = vunpack.c.l.b16 %v700
    %v749 = vunpack.c.l.b16 %v701
    %v750 = vunpack.c.l.b16 %v702
    %v751 = vunpack.c.l.b16 %v703
    %v752 = vunpack.c.l.b16 %v704
    %v753 = vunpack.c.l.b16 %v705
    %v754 = vpack.c.b16 %v739, %v738
    %v755 = vpack.c.b16 %v741, %v740
    %v756 = vpack.c.b16 %v743, %v742
    %v757 = vpack.c.b16 %v745, %v744
    %v758 = vpack.c.b16 %v747, %v746
    %v759 = vpack.c.b16 %v749, %v748
    %v760 = vpack.c.b16 %v751, %v750
    %v761 = vpack.c.b16 %v753, %v752
    %v786 = vunpack.c.l.b16 %v706
    %v787 = vunpack.c.l.b16 %v707
    %v788 = vunpack.c.l.b16 %v708
    %v789 = vunpack.c.l.b16 %v709
    %v790 = vunpack.c.l.b16 %v710
    %v791 = vunpack.c.l.b16 %v711
    %v792 = vunpack.c.l.b16 %v712
    %v793 = vunpack.c.l.b16 %v713
    %v794 = vunpack.c.l.b16 %v714
    %v795 = vunpack.c.l.b16 %v715
    %v796 = vunpack.c.l.b16 %v716
    %v797 = vunpack.c.l.b16 %v717
    %v798 = vunpack.c.l.b16 %v718
    %v799 = vunpack.c.l.b16 %v719
    %v800 = vunpack.c.l.b16 %v720
    %v801 = vunpack.c.l.b16 %v721
    %v802 = vpack.c.b16 %v787, %v786
    %v803 = vpack.c.b16 %v789, %v788
    %v804 = vpack.c.b16 %v791, %v790
    %v805 = vpack.c.b16 %v793, %v792
    %v806 = vpack.c.b16 %v795, %v794
    %v807 = vpack.c.b16 %v797, %v796
    %v808 = vpack.c.b16 %v799, %v798
    %v809 = vpack.c.b16 %v801, %v800
    %818 = vmatprep.subr.bf16.mxu0 0
    %819 = vmatpush1.bf16.msra.mxu0 %v809
    %820 = vmatprep.subr.bf16.mxu0 0
    %821 = vmatpush1.bf16.msra.mxu0 %v808
    %822 = vmatprep.subr.bf16.mxu0 0
    %823 = vmatpush1.bf16.msra.mxu0 %v807
    %824 = vmatprep.subr.bf16.mxu0 0
    %825 = vmatpush1.bf16.msra.mxu0 %v806
    %826 = vmatprep.subr.bf16.mxu0 0
    %827 = vmatpush1.bf16.msra.mxu0 %v805
    %828 = vmatprep.subr.bf16.mxu0 0
    %829 = vmatpush1.bf16.msra.mxu0 %v804
    %830 = vmatprep.subr.bf16.mxu0 0
    %831 = vmatpush1.bf16.msra.mxu0 %v803
    %832 = vmatprep.subr.bf16.mxu0 0
    %833 = vmatpush1.bf16.msra.mxu0 %v802
    %834 = vmatprep.subr.bf16.mxu0 0
    %835 = vmatpush2.bf16.msra.mxu0 0
    %836 = vmatprep.subr.bf16.mxu0 0
    %837 = vmatpush2.bf16.msra.mxu0 0
    %838 = vmatprep.subr.bf16.mxu0 0
    %839 = vmatpush2.bf16.msra.mxu0 0
    %840 = vmatprep.subr.bf16.mxu0 0
    %841 = vmatpush2.bf16.msra.mxu0 0
    %842 = vmatprep.subr.bf16.mxu0 0
    %843 = vmatpush2.bf16.msra.mxu0 0
    %844 = vmatprep.subr.bf16.mxu0 0
    %845 = vmatpush2.bf16.msra.mxu0 0
    %846 = vmatprep.subr.bf16.mxu0 0
    %847 = vmatpush2.bf16.msra.mxu0 0
    %848 = vmatprep.subr.bf16.mxu0 0
    %849 = vmatpush2.bf16.msra.mxu0 0
    %850 = vmatprep.mubr.bf16.mxu0 0
    %851 = vmatmul.mubr.bf16.gmra.mxu0 %v754
    %v852 = vpop.f32.mrf.mxu0
    %v853 = vadd.f32 0.0, %v852
    %v854 = vpop.f32.mrf.mxu0
    %v855 = vpop.f32.mrf.mxu0
    %v856 = vadd.f32 0.0, %v855
    %v857 = vpop.f32.mrf.mxu0
    %858 = vmatprep.mubr.bf16.mxu0 0
    %859 = vmatmul.mubr.bf16.gmra.mxu0 %v755
    %v860 = vpop.f32.mrf.mxu0
    %v861 = vadd.f32 0.0, %v860
    %v862 = vpop.f32.mrf.mxu0
    %v863 = vpop.f32.mrf.mxu0
    %v864 = vadd.f32 0.0, %v863
    %v865 = vpop.f32.mrf.mxu0
    %866 = vmatprep.mubr.bf16.mxu0 0
    %867 = vmatmul.mubr.bf16.gmra.mxu0 %v756
    %v868 = vpop.f32.mrf.mxu0
    %v869 = vadd.f32 0.0, %v868
    %v870 = vpop.f32.mrf.mxu0
    %v871 = vpop.f32.mrf.mxu0
    %v872 = vadd.f32 0.0, %v871
    %v873 = vpop.f32.mrf.mxu0
    %874 = vmatprep.mubr.bf16.mxu0 0
    %875 = vmatmul.mubr.bf16.gmra.mxu0 %v757
    %v876 = vpop.f32.mrf.mxu0
    %v877 = vadd.f32 0.0, %v876
    %v878 = vpop.f32.mrf.mxu0
    %v879 = vpop.f32.mrf.mxu0
    %v880 = vadd.f32 0.0, %v879
    %v881 = vpop.f32.mrf.mxu0
    %882 = vmatprep.mubr.bf16.mxu0 0
    %883 = vmatmul.mubr.bf16.gmra.mxu0 %v758
    %v884 = vpop.f32.mrf.mxu0
    %v885 = vadd.f32 0.0, %v884
    %v886 = vpop.f32.mrf.mxu0
    %v887 = vpop.f32.mrf.mxu0
    %v888 = vadd.f32 0.0, %v887
    %v889 = vpop.f32.mrf.mxu0
    %890 = vmatprep.mubr.bf16.mxu0 0
    %891 = vmatmul.mubr.bf16.gmra.mxu0 %v759
    %v892 = vpop.f32.mrf.mxu0
    %v893 = vadd.f32 0.0, %v892
    %v894 = vpop.f32.mrf.mxu0
    %v895 = vpop.f32.mrf.mxu0
    %v896 = vadd.f32 0.0, %v895
    %v897 = vpop.f32.mrf.mxu0
    %898 = vmatprep.mubr.bf16.mxu0 0
    %899 = vmatmul.mubr.bf16.gmra.mxu0 %v760
    %v900 = vpop.f32.mrf.mxu0
    %v901 = vadd.f32 0.0, %v900
    %v902 = vpop.f32.mrf.mxu0
    %v903 = vpop.f32.mrf.mxu0
    %v904 = vadd.f32 0.0, %v903
    %v905 = vpop.f32.mrf.mxu0
    %906 = vmatprep.mubr.bf16.mxu0 0
    %907 = vmatmul.mubr.bf16.gmra.mxu0 %v761
    %v908 = vpop.f32.mrf.mxu0
    %v909 = vadd.f32 0.0, %v908
    %v910 = vpop.f32.mrf.mxu0
    %v911 = vpop.f32.mrf.mxu0
    %v912 = vadd.f32 0.0, %v911
    %v913 = vpop.f32.mrf.mxu0
    %914 = vdwg.mxu0
    %v915 = vpack.c.bf16 %v856, %v853
    %v916 = vpack.c.bf16 %v864, %v861
    %v917 = vpack.c.bf16 %v872, %v869
    %v918 = vpack.c.bf16 %v880, %v877
    %v919 = vpack.c.bf16 %v888, %v885
    %v920 = vpack.c.bf16 %v896, %v893
    %v921 = vpack.c.bf16 %v904, %v901
    %v922 = vpack.c.bf16 %v912, %v909
    %v923 = vpack.c.bf16 %v112, %v112
    %924 = vmatprep.subr.bf16.mxu0 0
    %925 = vmatpush1.bf16.xpose.msra.mxu0 %v922
    %926 = vmatprep.subr.bf16.mxu0 0
    %927 = vmatpush1.bf16.xpose.msra.mxu0 %v921
    %928 = vmatprep.subr.bf16.mxu0 0
    %929 = vmatpush1.bf16.xpose.msra.mxu0 %v920
    %930 = vmatprep.subr.bf16.mxu0 0
    %931 = vmatpush1.bf16.xpose.msra.mxu0 %v919
    %932 = vmatprep.subr.bf16.mxu0 0
    %933 = vmatpush1.bf16.xpose.msra.mxu0 %v918
    %934 = vmatprep.subr.bf16.mxu0 0
    %935 = vmatpush1.bf16.xpose.msra.mxu0 %v917
    %936 = vmatprep.subr.bf16.mxu0 0
    %937 = vmatpush1.bf16.xpose.msra.mxu0 %v916
    %938 = vmatprep.subr.bf16.mxu0 0
    %939 = vmatpush1.bf16.xpose.msra.mxu0 %v915
    %940 = vmatprep.subr.bf16.mxu0 0
    %941 = vmatpush2.bf16.xpose.msra.mxu0 0
    %942 = vmatprep.subr.bf16.mxu0 0
    %943 = vmatpush2.bf16.xpose.msra.mxu0 0
    %944 = vmatprep.subr.bf16.mxu0 0
    %945 = vmatpush2.bf16.xpose.msra.mxu0 0
    %946 = vmatprep.subr.bf16.mxu0 0
    %947 = vmatpush2.bf16.xpose.msra.mxu0 0
    %948 = vmatprep.subr.bf16.mxu0 0
    %949 = vmatpush2.bf16.xpose.msra.mxu0 0
    %950 = vmatprep.subr.bf16.mxu0 0
    %951 = vmatpush2.bf16.xpose.msra.mxu0 0
    %952 = vmatprep.subr.bf16.mxu0 0
    %953 = vmatpush2.bf16.xpose.msra.mxu0 0
    %954 = vmatprep.subr.bf16.mxu0 0
    %955 = vmatpush2.bf16.xpose.msra.mxu0 0
    %956 = vmatprep.mubr.bf16.mxu0 0
    %957 = vmatmul.mubr.bf16.gmra.mxu0 %v923
    %v958 = vpop.f32.mrf.mxu0
    %v959 = vadd.f32 0.0, %v958
    %v960 = vpop.f32.mrf.mxu0
    %v961 = vpop.f32.mrf.mxu0
    %v962 = vpop.f32.mrf.mxu0
    %963 = vdwg.mxu0
    %965 = vset.pattern.permute.xlu0 127
    %966 = vperm.xlu0 %965, %v853
    %v967 = vpop.permute.xlu0 %966
    %970 = vset.pattern.permute.xlu0 127
    %971 = vperm.xlu0 %970, %v856
    %v972 = vpop.permute.xlu0 %971
    %975 = vset.pattern.permute.xlu0 127
    %976 = vperm.xlu0 %975, %v861
    %v977 = vpop.permute.xlu0 %976
    %980 = vset.pattern.permute.xlu0 127
    %981 = vperm.xlu0 %980, %v864
    %v982 = vpop.permute.xlu0 %981
    %985 = vset.pattern.permute.xlu0 127
    %986 = vperm.xlu0 %985, %v869
    %v987 = vpop.permute.xlu0 %986
    %990 = vset.pattern.permute.xlu0 127
    %991 = vperm.xlu0 %990, %v872
    %v992 = vpop.permute.xlu0 %991
    %995 = vset.pattern.permute.xlu0 127
    %996 = vperm.xlu0 %995, %v877
    %v997 = vpop.permute.xlu0 %996
    %1000 = vset.pattern.permute.xlu0 127
    %1001 = vperm.xlu0 %1000, %v880
    %v1002 = vpop.permute.xlu0 %1001
    %v1004 = vlaneseq
    %v1005 = vshrl.u32 %v1004, 7
    %v1006 = vsub.s32 0, %v1005
    %v1007 = vrot.slane %v959, %v1006
    %v1008 = vadd.f32 %v967, %v1007
    %v1009 = vadd.f32 %v972, %v1007
    %v1010 = vadd.f32 %v977, %v1007
    %v1011 = vadd.f32 %v982, %v1007
    %v1012 = vadd.f32 %v987, %v1007
    %v1013 = vadd.f32 %v992, %v1007
    %v1014 = vadd.f32 %v997, %v1007
    %v1015 = vadd.f32 %v1002, %v1007
    %v1016 = vld [vmem:[#allocation8] sm:$0xf]
    %v1017 = vld [vmem:[#allocation8 + $0x4] sm:$0xf]
    %v1018 = vld [vmem:[#allocation8 + $0x8] sm:$0xf]
    %v1019 = vld [vmem:[#allocation8 + $0xc] sm:$0xf]
    %v1020 = vld [vmem:[#allocation8 + $0x10] sm:$0xf]
    %v1021 = vld [vmem:[#allocation8 + $0x14] sm:$0xf]
    %v1022 = vld [vmem:[#allocation8 + $0x18] sm:$0xf]
    %v1023 = vld [vmem:[#allocation8 + $0x1c] sm:$0xf]
    %v1024 = vunpack.c.l.bf16 %v1016
    %v1025 = vunpack.c.l.bf16 %v1017
    %v1026 = vunpack.c.l.bf16 %v1018
    %v1027 = vunpack.c.l.bf16 %v1019
    %v1028 = vunpack.c.l.bf16 %v1020
    %v1029 = vunpack.c.l.bf16 %v1021
    %v1030 = vunpack.c.l.bf16 %v1022
    %v1031 = vunpack.c.l.bf16 %v1023
    %v1032 = vadd.f32 %v1008, %v1024
    %v1033 = vadd.f32 %v1009, %v1025
    %v1034 = vadd.f32 %v1010, %v1026
    %v1035 = vadd.f32 %v1011, %v1027
    %v1036 = vadd.f32 %v1012, %v1028
    %v1037 = vadd.f32 %v1013, %v1029
    %v1038 = vadd.f32 %v1014, %v1030
    %v1039 = vadd.f32 %v1015, %v1031
    %v1040 = vmul.f32 %v1032, 0.2
    %v1041 = vmul.f32 %v1033, 0.2
    %v1042 = vmul.f32 %v1034, 0.2
    %v1043 = vmul.f32 %v1035, 0.2
    %v1044 = vmul.f32 %v1036, 0.2
    %v1045 = vmul.f32 %v1037, 0.2
    %v1046 = vmul.f32 %v1038, 0.2
    %v1047 = vmul.f32 %v1039, 0.2
    %v1048 = vmax.f32 %v1032, %v1040
    %v1049 = vmax.f32 %v1033, %v1041
    %v1050 = vmax.f32 %v1034, %v1042
    %v1051 = vmax.f32 %v1035, %v1043
    %v1052 = vmax.f32 %v1036, %v1044
    %v1053 = vmax.f32 %v1037, %v1045
    %v1054 = vmax.f32 %v1038, %v1046
    %v1055 = vmax.f32 %v1039, %v1047
    %1056 = vmax.xlane.f32.xlu0 %v1048
    %v1057 = vpop.xlane.xlu0 %1056
    %1058 = vmax.xlane.f32.xlu0 %v1049
    %v1059 = vpop.xlane.xlu0 %1058
    %1060 = vmax.xlane.f32.xlu0 %v1050
    %v1061 = vpop.xlane.xlu0 %1060
    %1062 = vmax.xlane.f32.xlu0 %v1051
    %v1063 = vpop.xlane.xlu0 %1062
    %1064 = vmax.xlane.f32.xlu0 %v1052
    %v1065 = vpop.xlane.xlu0 %1064
    %1066 = vmax.xlane.f32.xlu0 %v1053
    %v1067 = vpop.xlane.xlu0 %1066
    %1068 = vmax.xlane.f32.xlu0 %v1054
    %v1069 = vpop.xlane.xlu0 %1068
    %1070 = vmax.xlane.f32.xlu0 %v1055
    %v1071 = vpop.xlane.xlu0 %1070
    %v1072 = vsub.f32 %v1048, %v1057
    %v1073 = vsub.f32 %v1049, %v1059
    %v1074 = vsub.f32 %v1050, %v1061
    %v1075 = vsub.f32 %v1051, %v1063
    %v1076 = vsub.f32 %v1052, %v1065
    %v1077 = vsub.f32 %v1053, %v1067
    %v1078 = vsub.f32 %v1054, %v1069
    %v1079 = vsub.f32 %v1055, %v1071
    %v1080 = vmul.f32 %v1072, 1.442695
    %v1081 = vpow.pop %v1080
    %v1082 = vmul.f32 %v1073, 1.442695
    %v1083 = vpow.pop %v1082
    %v1084 = vmul.f32 %v1074, 1.442695
    %v1085 = vpow.pop %v1084
    %v1086 = vmul.f32 %v1075, 1.442695
    %v1087 = vpow.pop %v1086
    %v1088 = vmul.f32 %v1076, 1.442695
    %v1089 = vpow.pop %v1088
    %v1090 = vmul.f32 %v1077, 1.442695
    %v1091 = vpow.pop %v1090
    %v1092 = vmul.f32 %v1078, 1.442695
    %v1093 = vpow.pop %v1092
    %v1094 = vmul.f32 %v1079, 1.442695
    %v1095 = vpow.pop %v1094
    %1096 = vadd.xlane.f32.xlu0 %v1081
    %v1097 = vpop.xlane.xlu0 %1096
    %1098 = vadd.xlane.f32.xlu0 %v1083
    %v1099 = vpop.xlane.xlu0 %1098
    %1100 = vadd.xlane.f32.xlu0 %v1085
    %v1101 = vpop.xlane.xlu0 %1100
    %1102 = vadd.xlane.f32.xlu0 %v1087
    %v1103 = vpop.xlane.xlu0 %1102
    %1104 = vadd.xlane.f32.xlu0 %v1089
    %v1105 = vpop.xlane.xlu0 %1104
    %1106 = vadd.xlane.f32.xlu0 %v1091
    %v1107 = vpop.xlane.xlu0 %1106
    %1108 = vadd.xlane.f32.xlu0 %v1093
    %v1109 = vpop.xlane.xlu0 %1108
    %1110 = vadd.xlane.f32.xlu0 %v1095
    %v1111 = vpop.xlane.xlu0 %1110
    %v1112 = vrcp.pop %v1097
    %v1113 = vrcp.pop %v1099
    %v1114 = vrcp.pop %v1101
    %v1115 = vrcp.pop %v1103
    %v1116 = vrcp.pop %v1105
    %v1117 = vrcp.pop %v1107
    %v1118 = vrcp.pop %v1109
    %v1119 = vrcp.pop %v1111
    %v1120 = vpack.c.bf16 %v1083, %v1081
    %v1121 = vpack.c.bf16 %v1087, %v1085
    %v1122 = vpack.c.bf16 %v1091, %v1089
    %v1123 = vpack.c.bf16 %v1095, %v1093
    %1124 = vmatprep.subr.bf16.mxu0 0
    %1125 = vmatpush1.bf16.msra.mxu0 %v922
    %1126 = vmatprep.subr.bf16.mxu0 0
    %1127 = vmatpush1.bf16.msra.mxu0 %v921
    %1128 = vmatprep.subr.bf16.mxu0 0
    %1129 = vmatpush1.bf16.msra.mxu0 %v920
    %1130 = vmatprep.subr.bf16.mxu0 0
    %1131 = vmatpush1.bf16.msra.mxu0 %v919
    %1132 = vmatprep.subr.bf16.mxu0 0
    %1133 = vmatpush1.bf16.msra.mxu0 %v918
    %1134 = vmatprep.subr.bf16.mxu0 0
    %1135 = vmatpush1.bf16.msra.mxu0 %v917
    %1136 = vmatprep.subr.bf16.mxu0 0
    %1137 = vmatpush1.bf16.msra.mxu0 %v916
    %1138 = vmatprep.subr.bf16.mxu0 0
    %1139 = vmatpush1.bf16.msra.mxu0 %v915
    %1140 = vmatprep.subr.bf16.mxu0 0
    %1141 = vmatpush2.bf16.msra.mxu0 0
    %1142 = vmatprep.subr.bf16.mxu0 0
    %1143 = vmatpush2.bf16.msra.mxu0 0
    %1144 = vmatprep.subr.bf16.mxu0 0
    %1145 = vmatpush2.bf16.msra.mxu0 0
    %1146 = vmatprep.subr.bf16.mxu0 0
    %1147 = vmatpush2.bf16.msra.mxu0 0
    %1148 = vmatprep.subr.bf16.mxu0 0
    %1149 = vmatpush2.bf16.msra.mxu0 0
    %1150 = vmatprep.subr.bf16.mxu0 0
    %1151 = vmatpush2.bf16.msra.mxu0 0
    %1152 = vmatprep.subr.bf16.mxu0 0
    %1153 = vmatpush2.bf16.msra.mxu0 0
    %1154 = vmatprep.subr.bf16.mxu0 0
    %1155 = vmatpush2.bf16.msra.mxu0 0
    %1156 = vmatprep.mubr.bf16.mxu0 0
    %1157 = vmatmul.mubr.bf16.gmra.mxu0 %v1120
    %v1158 = vpop.f32.mrf.mxu0
    %v1159 = vadd.f32 0.0, %v1158
    %v1160 = vpop.f32.mrf.mxu0
    %v1161 = vpop.f32.mrf.mxu0
    %v1162 = vadd.f32 0.0, %v1161
    %v1163 = vpop.f32.mrf.mxu0
    %1164 = vmatprep.mubr.bf16.mxu0 0
    %1165 = vmatmul.mubr.bf16.gmra.mxu0 %v1121
    %v1166 = vpop.f32.mrf.mxu0
    %v1167 = vadd.f32 0.0, %v1166
    %v1168 = vpop.f32.mrf.mxu0
    %v1169 = vpop.f32.mrf.mxu0
    %v1170 = vadd.f32 0.0, %v1169
    %v1171 = vpop.f32.mrf.mxu0
    %1172 = vmatprep.mubr.bf16.mxu0 0
    %1173 = vmatmul.mubr.bf16.gmra.mxu0 %v1122
    %v1174 = vpop.f32.mrf.mxu0
    %v1175 = vadd.f32 0.0, %v1174
    %v1176 = vpop.f32.mrf.mxu0
    %v1177 = vpop.f32.mrf.mxu0
    %v1178 = vadd.f32 0.0, %v1177
    %v1179 = vpop.f32.mrf.mxu0
    %1180 = vmatprep.mubr.bf16.mxu0 0
    %1181 = vmatmul.mubr.bf16.gmra.mxu0 %v1123
    %v1182 = vpop.f32.mrf.mxu0
    %v1183 = vadd.f32 0.0, %v1182
    %v1184 = vpop.f32.mrf.mxu0
    %v1185 = vpop.f32.mrf.mxu0
    %v1186 = vadd.f32 0.0, %v1185
    %v1187 = vpop.f32.mrf.mxu0
    %1188 = vdwg.mxu0
    %v1189 = vmul.f32 %v1159, %v1112
    %v1190 = vmul.f32 %v1162, %v1113
    %v1191 = vmul.f32 %v1167, %v1114
    %v1192 = vmul.f32 %v1170, %v1115
    %v1193 = vmul.f32 %v1175, %v1116
    %v1194 = vmul.f32 %v1178, %v1117
    %v1195 = vmul.f32 %v1183, %v1118
    %v1196 = vmul.f32 %v1186, %v1119
    %v1197 = vlaneseq
    %v1198 = vshrl.u32 %v1197, 7
    %v1199 = vsub.s32 0, %v1198
    %v1200 = vrot.slane %v113, %v1199
    %v1201 = vadd.f32 %v1189, %v1200
    %v1202 = vadd.f32 %v1190, %v1200
    %v1203 = vadd.f32 %v1191, %v1200
    %v1204 = vadd.f32 %v1192, %v1200
    %v1205 = vadd.f32 %v1193, %v1200
    %v1206 = vadd.f32 %v1194, %v1200
    %v1207 = vadd.f32 %v1195, %v1200
    %v1208 = vadd.f32 %v1196, %v1200
    %v1209 = vpack.c.bf16 %v1202, %v1201
    %v1210 = vpack.c.bf16 %v1204, %v1203
    %v1211 = vpack.c.bf16 %v1206, %v1205
    %v1212 = vpack.c.bf16 %v1208, %v1207
    %v1213 = vld [vmem:[#allocation12] sm:$0xf]
    %v1214 = vld [vmem:[#allocation12 + $0x4] sm:$0xf]
    %v1215 = vld [vmem:[#allocation12 + $0x8] sm:$0xf]
    %v1216 = vld [vmem:[#allocation12 + $0xc] sm:$0xf]
    %v1217 = vld [vmem:[#allocation12 + $0x10] sm:$0xf]
    %v1218 = vld [vmem:[#allocation12 + $0x14] sm:$0xf]
    %v1219 = vld [vmem:[#allocation12 + $0x18] sm:$0xf]
    %v1220 = vld [vmem:[#allocation12 + $0x1c] sm:$0xf]
    %v1221 = vld [vmem:[#allocation12 + $0x20] sm:$0xf]
    %v1222 = vld [vmem:[#allocation12 + $0x24] sm:$0xf]
    %v1223 = vld [vmem:[#allocation12 + $0x28] sm:$0xf]
    %v1224 = vld [vmem:[#allocation12 + $0x2c] sm:$0xf]
    %v1225 = vld [vmem:[#allocation12 + $0x30] sm:$0xf]
    %v1226 = vld [vmem:[#allocation12 + $0x34] sm:$0xf]
    %v1227 = vld [vmem:[#allocation12 + $0x38] sm:$0xf]
    %v1228 = vld [vmem:[#allocation12 + $0x3c] sm:$0xf]
    %v1229 = vlaneseq
    %v1230 = vshrl.u32 %v1229, 7
    %v1231 = vsub.s32 0, %v1230
    %v1232 = vrot.slane %v114, %v1231
    %v1249 = vunpack.c.l.b16 %v1213
    %v1250 = vunpack.c.l.b16 %v1214
    %v1251 = vunpack.c.l.b16 %v1215
    %v1252 = vunpack.c.l.b16 %v1216
    %v1253 = vunpack.c.l.b16 %v1217
    %v1254 = vunpack.c.l.b16 %v1218
    %v1255 = vunpack.c.l.b16 %v1219
    %v1256 = vunpack.c.l.b16 %v1220
    %v1257 = vunpack.c.l.b16 %v1221
    %v1258 = vunpack.c.l.b16 %v1222
    %v1259 = vunpack.c.l.b16 %v1223
    %v1260 = vunpack.c.l.b16 %v1224
    %v1261 = vunpack.c.l.b16 %v1225
    %v1262 = vunpack.c.l.b16 %v1226
    %v1263 = vunpack.c.l.b16 %v1227
    %v1264 = vunpack.c.l.b16 %v1228
    %v1265 = vpack.c.b16 %v1250, %v1249
    %v1266 = vpack.c.b16 %v1252, %v1251
    %v1267 = vpack.c.b16 %v1254, %v1253
    %v1268 = vpack.c.b16 %v1256, %v1255
    %v1269 = vpack.c.b16 %v1258, %v1257
    %v1270 = vpack.c.b16 %v1260, %v1259
    %v1271 = vpack.c.b16 %v1262, %v1261
    %v1272 = vpack.c.b16 %v1264, %v1263
    %1281 = vmatprep.subr.bf16.mxu0 0
    %1282 = vmatpush1.bf16.msra.mxu0 %v1272
    %1283 = vmatprep.subr.bf16.mxu0 0
    %1284 = vmatpush1.bf16.msra.mxu0 %v1271
    %1285 = vmatprep.subr.bf16.mxu0 0
    %1286 = vmatpush1.bf16.msra.mxu0 %v1270
    %1287 = vmatprep.subr.bf16.mxu0 0
    %1288 = vmatpush1.bf16.msra.mxu0 %v1269
    %1289 = vmatprep.subr.bf16.mxu0 0
    %1290 = vmatpush1.bf16.msra.mxu0 %v1268
    %1291 = vmatprep.subr.bf16.mxu0 0
    %1292 = vmatpush1.bf16.msra.mxu0 %v1267
    %1293 = vmatprep.subr.bf16.mxu0 0
    %1294 = vmatpush1.bf16.msra.mxu0 %v1266
    %1295 = vmatprep.subr.bf16.mxu0 0
    %1296 = vmatpush1.bf16.msra.mxu0 %v1265
    %1297 = vmatprep.subr.bf16.mxu0 0
    %1298 = vmatpush2.bf16.msra.mxu0 0
    %1299 = vmatprep.subr.bf16.mxu0 0
    %1300 = vmatpush2.bf16.msra.mxu0 0
    %1301 = vmatprep.subr.bf16.mxu0 0
    %1302 = vmatpush2.bf16.msra.mxu0 0
    %1303 = vmatprep.subr.bf16.mxu0 0
    %1304 = vmatpush2.bf16.msra.mxu0 0
    %1305 = vmatprep.subr.bf16.mxu0 0
    %1306 = vmatpush2.bf16.msra.mxu0 0
    %1307 = vmatprep.subr.bf16.mxu0 0
    %1308 = vmatpush2.bf16.msra.mxu0 0
    %1309 = vmatprep.subr.bf16.mxu0 0
    %1310 = vmatpush2.bf16.msra.mxu0 0
    %1311 = vmatprep.subr.bf16.mxu0 0
    %1312 = vmatpush2.bf16.msra.mxu0 0
    %1313 = vmatprep.mubr.bf16.mxu0 0
    %1314 = vmatmul.mubr.bf16.gmra.mxu0 %v1209
    %v1315 = vpop.f32.mrf.mxu0
    %v1316 = vadd.f32 %v1232, %v1315
    %v1317 = vpop.f32.mrf.mxu0
    %v1318 = vpop.f32.mrf.mxu0
    %v1319 = vadd.f32 %v1232, %v1318
    %v1320 = vpop.f32.mrf.mxu0
    %1321 = vmatprep.mubr.bf16.mxu0 0
    %1322 = vmatmul.mubr.bf16.gmra.mxu0 %v1210
    %v1323 = vpop.f32.mrf.mxu0
    %v1324 = vadd.f32 %v1232, %v1323
    %v1325 = vpop.f32.mrf.mxu0
    %v1326 = vpop.f32.mrf.mxu0
    %v1327 = vadd.f32 %v1232, %v1326
    %v1328 = vpop.f32.mrf.mxu0
    %1329 = vmatprep.mubr.bf16.mxu0 0
    %1330 = vmatmul.mubr.bf16.gmra.mxu0 %v1211
    %v1331 = vpop.f32.mrf.mxu0
    %v1332 = vadd.f32 %v1232, %v1331
    %v1333 = vpop.f32.mrf.mxu0
    %v1334 = vpop.f32.mrf.mxu0
    %v1335 = vadd.f32 %v1232, %v1334
    %v1336 = vpop.f32.mrf.mxu0
    %1337 = vmatprep.mubr.bf16.mxu0 0
    %1338 = vmatmul.mubr.bf16.gmra.mxu0 %v1212
    %v1339 = vpop.f32.mrf.mxu0
    %v1340 = vadd.f32 %v1232, %v1339
    %v1341 = vpop.f32.mrf.mxu0
    %v1342 = vpop.f32.mrf.mxu0
    %v1343 = vadd.f32 %v1232, %v1342
    %v1344 = vpop.f32.mrf.mxu0
    %1345 = vdwg.mxu0
    %1346 = vst [vmem:[#allocation14] sm:$0xff] %v1316
    %1347 = vst [vmem:[#allocation14 + $0x8] sm:$0xff] %v1319
    %1348 = vst [vmem:[#allocation14 + $0x10] sm:$0xff] %v1324
    %1349 = vst [vmem:[#allocation14 + $0x18] sm:$0xff] %v1327
    %1350 = vst [vmem:[#allocation14 + $0x20] sm:$0xff] %v1332
    %1351 = vst [vmem:[#allocation14 + $0x28] sm:$0xff] %v1335
    %1352 = vst [vmem:[#allocation14 + $0x30] sm:$0xff] %v1340
    %1353 = vst [vmem:[#allocation14 + $0x38] sm:$0xff] %v1343
    // Predicated region
    $region54: #{tpu_custom_call.1} parent=1 // pred_check
      _
    $region55: #{tpu_custom_call.1} parent=1 // pred_check_branch
      %1355 = sbr.rel (0) target = $region57
    $region56: #{tpu_custom_call.1} parent=1 // pred_region
      %s1357 = ssub.s32 1024, 1024
      %1358 = vsyncadd [#allocation5], %s1357
      %s1359 = sshll.u32 [#allocation14], 4
      %s1360 = int_to_ptr.vmem [resolvable:$true] %s1359
      %1365 = dma.vmem_to_hbm [thread:$0]  %s1360, 1024, %s7, [#allocation5], 128, 128, 8
    $region57: #{tpu_custom_call.1} parent=1 // pred_fallthru
      _
    // Predicated region
    $region58: #{tpu_custom_call.1} parent=1 // pred_check
      _
    $region59: #{tpu_custom_call.1} parent=1 // pred_check_branch
      %1367 = sbr.rel (0) target = $region61
    $region60: #{tpu_custom_call.1} parent=1 // pred_region
      %1368 = dma.done [#allocation5], 1024
    $region61: #{tpu_custom_call.1} parent=1 // pred_fallthru
      _
    %1369 = vsyncpa [#allocation4], 1
    %1370 = vsyncpa [#allocation7], 1
    %1371 = vsyncpa [#allocation10], 1
    %1372 = vsyncpa [#allocation13], 1
    %1373 = vsyncpa [#allocation5], 1

</llo_original>
